<compile_context>
chip_gen: v5e
topology: v5e:2x2
jax: 0.10.0
libtpu: 0.0.40
codegen_flags: <defaults>
</compile_context>

<pallas_src>
import functools
import itertools

import jax
import jax.numpy as jnp
from jax.experimental import pallas as pl
from jax.experimental.pallas import tpu as pltpu


# --------------------------------------------------------------------------- #
# Kernel: one window of CascadedGroupAttention per grid step.
# Ref order: x, [wqkv, bqkv, wdw, bdw, ab] * num_head, wproj, bproj, out, scratch
# --------------------------------------------------------------------------- #
def _cga_kernel(x_ref, *rest, H, W, nh, d, qk, vd, kernels, scale, pmax):
    head_refs = [rest[5 * i:5 * i + 5] for i in range(nh)]
    wproj_ref, bproj_ref, o_ref, dwpad_ref = rest[5 * nh:5 * nh + 4]

    N = H * W
    base = pmax * (W + 1)                       # q row offset inside the halo scratch
    x = x_ref[0]                                # (N, C), channels on lane axis

    # Zero the halo scratch; only the centre rows [base:base+N] get rewritten
    # per head, so the halo stays zero => "same" padding with no HBM traffic.
    dwpad_ref[...] = jnp.zeros_like(dwpad_ref)

    # Column index of each token (for masking horizontal taps that cross a row).
    col = jax.lax.broadcasted_iota(jnp.int32, (N, 1), 0) % W
    masks = {dx: jnp.logical_and(col + dx >= 0, col + dx < W)
             for dx in range(-pmax, pmax + 1) if dx != 0}

    prev = None
    head_outs = []
    for i in range(nh):
        wqkv_ref, bqkv_ref, wdw_ref, bdw_ref, ab_ref = head_refs[i]

        chunk = x[:, i * d:(i + 1) * d]                      # (N, d)
        inp = chunk if i == 0 else prev + chunk              # cascade

        # 1x1 Conv2dBN (qkv): one full-K MXU matmul, BN already folded.
        qkv = jnp.dot(inp, wqkv_ref[...],
                      preferred_element_type=jnp.float32) + bqkv_ref[...]
        q = qkv[:, :qk]                                      # (N, qk)
        k = qkv[:, qk:2 * qk]                                # (N, qk)
        v = qkv[:, 2 * qk:2 * qk + vd]                       # (N, vd)

        # Depthwise KxK Conv2dBN on q ("same" padding via the zero halo).
        K = kernels[i]
        p = (K - 1) // 2
        dwpad_ref[base:base + N, :] = q
        wdw = wdw_ref[...]                                   # (K*K, qk)
        acc = jnp.zeros((N, qk), jnp.float32)
        for kh in range(K):
            dy = kh - p
            for kw in range(K):
                dx = kw - p
                s = dy * W + dx
                tap = dwpad_ref[base + s:base + s + N, :]    # (N, qk)
                if dx != 0:
                    tap = jnp.where(masks[dx], tap, 0.0)
                j = kh * K + kw
                acc = acc + tap * wdw[j:j + 1, :]
        qd = acc + bdw_ref[...]                              # (N, qk)

        # Attention: (N, qk) . (N, qk)^T contracted on channels (no transpose).
        logits = jax.lax.dot_general(qd, k, (((1,), (1,)), ((), ())),
                                     preferred_element_type=jnp.float32)
        logits = logits * scale + ab_ref[...]
        logits = logits - jnp.max(logits, axis=-1, keepdims=True)
        e = jnp.exp(logits)
        attn = e / jnp.sum(e, axis=-1, keepdims=True)

        out = jnp.dot(attn, v, preferred_element_type=jnp.float32)   # (N, vd)
        prev = out
        head_outs.append(out)

    cat = jnp.concatenate(head_outs, axis=-1)                # (N, vd*nh)
    act = jnp.maximum(cat, 0.0)                              # proj ReLU
    y = jnp.dot(act, wproj_ref[...],
                preferred_element_type=jnp.float32) + bproj_ref[...]
    o_ref[0] = y.astype(o_ref.dtype)


# --------------------------------------------------------------------------- #
# Wrapper around pallas_call (windows already flattened to tokens).
# --------------------------------------------------------------------------- #
def _cga_windows_pallas(xw, fused, *, H, W, nh, d, qk, vd, kernels, scale):
    Bp, N, C = xw.shape
    assert N == H * W and C == nh * d
    for (_, _, _, _, ab) in fused["heads"]:
        assert ab.shape == (N, N)
    pmax = max((K - 1) // 2 for K in kernels)

    inputs = [xw]
    in_specs = [pl.BlockSpec((1, N, C), lambda b: (b, 0, 0))]
    for i in range(nh):
        for arr in fused["heads"][i]:                        # all 2-D arrays
            inputs.append(arr)
            in_specs.append(pl.BlockSpec(arr.shape, lambda b: (0, 0)))
    inputs += [fused["proj_w"], fused["proj_b"]]
    in_specs += [pl.BlockSpec(fused["proj_w"].shape, lambda b: (0, 0)),
                 pl.BlockSpec(fused["proj_b"].shape, lambda b: (0, 0))]

    kernel = functools.partial(
        _cga_kernel, H=H, W=W, nh=nh, d=d, qk=qk, vd=vd,
        kernels=tuple(kernels), scale=float(scale), pmax=pmax)

    scratch_rows = N + 2 * pmax * (W + 1)                    # token rows + halo
    return pl.pallas_call(
        kernel,
        out_shape=jax.ShapeDtypeStruct((Bp, N, C), xw.dtype),
        grid_spec=pltpu.PrefetchScalarGridSpec(
            num_scalar_prefetch=0,
            grid=(Bp,),
            in_specs=in_specs,
            out_specs=pl.BlockSpec((1, N, C), lambda b: (b, 0, 0)),
            scratch_shapes=[pltpu.VMEM((scratch_rows, qk), jnp.float32)],
        ),
        compiler_params=pltpu.CompilerParams(
            dimension_semantics=("parallel",)),
    )(*inputs)


# --------------------------------------------------------------------------- #
# Parameter fusion (Conv2dBN -> fused weight/bias, inference-mode BN).
# --------------------------------------------------------------------------- #
def _fuse_conv_bn(w_oihw, gamma, beta, mean, var, eps=1e-5):
    s = gamma / jnp.sqrt(var + eps)
    w = (w_oihw * s[:, None, None, None]).astype(jnp.float32)
    b = (beta - mean * s).astype(jnp.float32)
    return w, b


def _prepare_fused(params, *, nh, qk, vd, kernels, eps=1e-5):
    heads = []
    for i in range(nh):
        wq, gq, bq, mq, vq = params["qkv"][i]
        wf, bf = _fuse_conv_bn(wq, gq, bq, mq, vq, eps)
        S = wf.shape[0]
        wqkv = jnp.transpose(wf[:, :, 0, 0])                 # (d, 2qk+vd)
        bqkv = bf.reshape(1, S)

        w_dw, g_dw, b_dw, m_dw, v_dw = params["dwc"][i]
        K = kernels[i]
        assert K % 2 == 1, "depthwise kernel must be odd for 'same' padding"
        assert w_dw.shape == (qk, 1, K, K)
        wdf, bdf = _fuse_conv_bn(w_dw, g_dw, b_dw, m_dw, v_dw, eps)
        wdw = jnp.transpose(wdf[:, 0, :, :], (1, 2, 0)).reshape(K * K, qk)
        bdw = bdf.reshape(1, qk)

        ab = params["ab"][i].astype(jnp.float32)             # (N, N)
        heads.append((wqkv, bqkv, wdw, bdw, ab))

    wp, gp, bp, mp, vp = params["proj"]
    wpf, bpf = _fuse_conv_bn(wp, gp, bp, mp, vp, eps)
    proj_w = jnp.transpose(wpf[:, :, 0, 0])                  # (vd*nh, embed_dim)
    proj_b = bpf.reshape(1, -1)
    return {"heads": heads, "proj_w": proj_w, "proj_b": proj_b}


# --------------------------------------------------------------------------- #
# Window partition / merge (semantics of LocalWindowAttention.forward).
# --------------------------------------------------------------------------- #
def _window_partition(x_nchw, wr):
    B, C, H, W = x_nchw.shape
    x = jnp.transpose(x_nchw, (0, 2, 3, 1))                  # NHWC
    pad_b = (wr - H % wr) % wr
    pad_r = (wr - W % wr) % wr
    if pad_b or pad_r:
        x = jnp.pad(x, ((0, 0), (0, pad_b), (0, pad_r), (0, 0)))
    nH, nW = (H + pad_b) // wr, (W + pad_r) // wr
    x = x.reshape(B, nH, wr, nW, wr, C).transpose(0, 1, 3, 2, 4, 5)
    return x.reshape(B * nH * nW, wr, wr, C), (B, C, H, W, nH, nW)


def _window_merge(yw, meta, wr):
    B, _, H, W, nH, nW = meta
    Cout = yw.shape[-1]
    y = yw.reshape(B, nH, nW, wr, wr, Cout).transpose(0, 1, 3, 2, 4, 5)
    y = y.reshape(B, nH * wr, nW * wr, Cout)[:, :H, :W, :]
    return jnp.transpose(y, (0, 3, 1, 2))


def local_window_attention(x_nchw, params, *, embed_dim, q_k_dim, num_head,
                           multi_v, resolution, window_resolution, kernels):
    vd = int(multi_v * q_k_dim)
    d = embed_dim // num_head
    assert vd == d, "cascade (prev head output + next chunk) needs v_dim == embed_dim//num_head"
    scale = q_k_dim ** (-0.5)
    fused = _prepare_fused(params, nh=num_head, qk=q_k_dim, vd=vd, kernels=kernels)

    B, C, H, W = x_nchw.shape
    if resolution <= window_resolution:
        xw = jnp.transpose(x_nchw, (0, 2, 3, 1)).reshape(B, H * W, C)
        yw = _cga_windows_pallas(xw, fused, H=H, W=W, nh=num_head, d=d,
                                 qk=q_k_dim, vd=vd, kernels=kernels, scale=scale)
        return jnp.transpose(yw.reshape(B, H, W, C), (0, 3, 1, 2))

    wr = window_resolution
    xw4, meta = _window_partition(x_nchw, wr)
    Bp = xw4.shape[0]
    xw = xw4.reshape(Bp, wr * wr, C)
    yw = _cga_windows_pallas(xw, fused, H=wr, W=wr, nh=num_head, d=d,
                             qk=q_k_dim, vd=vd, kernels=kernels, scale=scale)
    return _window_merge(yw.reshape(Bp, wr, wr, C), meta, wr)


# --------------------------------------------------------------------------- #
# Pure-JAX reference (mirrors the PyTorch forward, inference-mode BN).
# --------------------------------------------------------------------------- #
def _conv_bn_ref(x, w, gamma, beta, mean, var, eps=1e-5, pad=0, groups=1):
    y = jax.lax.conv_general_dilated(
        x.astype(jnp.float32), w.astype(jnp.float32), window_strides=(1, 1),
        padding=[(pad, pad), (pad, pad)],
        dimension_numbers=("NCHW", "OIHW", "NCHW"),
        feature_group_count=groups, precision=jax.lax.Precision.HIGHEST)
    s = gamma / jnp.sqrt(var + eps)
    return y * s[None, :, None, None] + (beta - mean * s)[None, :, None, None]


def _cga_ref(x, params, *, nh, qk, vd, kernels, scale):
    B, C, H, W = x.shape
    d = C // nh
    N = H * W
    outs = []
    feat = None
    for i in range(nh):
        chunk = x[:, i * d:(i + 1) * d]
        feat = chunk if i == 0 else feat + chunk
        f = _conv_bn_ref(feat, *params["qkv"][i], pad=0, groups=1)
        q, k, v = f[:, :qk], f[:, qk:2 * qk], f[:, 2 * qk:]
        K = kernels[i]
        q = _conv_bn_ref(q, *params["dwc"][i], pad=(K - 1) // 2, groups=qk)
        qf, kf, vf = q.reshape(B, qk, N), k.reshape(B, qk, N), v.reshape(B, vd, N)
        attn = jnp.einsum("bcn,bcm->bnm", qf, kf,
                          precision=jax.lax.Precision.HIGHEST) * scale + params["ab"][i]
        attn = jax.nn.softmax(attn, axis=-1)
        feat = jnp.einsum("bcm,bnm->bcn", vf, attn,
                          precision=jax.lax.Precision.HIGHEST).reshape(B, vd, H, W)
        outs.append(feat)
    y = jnp.maximum(jnp.concatenate(outs, axis=1), 0.0)
    return _conv_bn_ref(y, *params["proj"], pad=0, groups=1)


def local_window_attention_ref(x_nchw, params, *, embed_dim, q_k_dim, num_head,
                               multi_v, resolution, window_resolution, kernels):
    vd = int(multi_v * q_k_dim)
    scale = q_k_dim ** (-0.5)
    if resolution <= window_resolution:
        return _cga_ref(x_nchw, params, nh=num_head, qk=q_k_dim, vd=vd,
                        kernels=kernels, scale=scale)
    wr = window_resolution
    xw4, meta = _window_partition(x_nchw, wr)
    y = _cga_ref(jnp.transpose(xw4, (0, 3, 1, 2)), params, nh=num_head,
                 qk=q_k_dim, vd=vd, kernels=kernels, scale=scale)
    return _window_merge(jnp.transpose(y, (0, 2, 3, 1)), meta, wr)


# --------------------------------------------------------------------------- #
if __name__ == "__main__":
    key = jax.random.PRNGKey(0)
    keys = iter(jax.random.split(key, 64))

    embed_dim, q_k_dim, num_head, multi_v = 32, 8, 2, 2.0
    resolution, window_resolution = 8, 4
    kernels = [3, 5]
    batch = 2
    vd = int(multi_v * q_k_dim)
    d = embed_dim // num_head
    wr = min(window_resolution, resolution)
    N = wr * wr

    def nrm(shape, s=0.1):
        return s * jax.random.normal(next(keys), shape, dtype=jnp.float32)

    def bn(cout):
        return (1.0 + nrm((cout,)), nrm((cout,)), nrm((cout,)),
                jnp.abs(1.0 + nrm((cout,))))

    params = {"qkv": [], "dwc": [], "ab": [], "proj": None}
    for i in range(num_head):
        S = 2 * q_k_dim + vd
        params["qkv"].append((nrm((S, d, 1, 1)),) + bn(S))
        K = kernels[i]
        params["dwc"].append((nrm((q_k_dim, 1, K, K)),) + bn(q_k_dim))
    params["proj"] = (nrm((embed_dim, vd * num_head, 1, 1)),) + bn(embed_dim)

    # attention biases + relative-offset index table, exactly as in the module
    points = list(itertools.product(range(wr), range(wr)))
    offsets, idxs = {}, []
    for p1 in points:
        for p2 in points:
            off = (abs(p1[0] - p2[0]), abs(p1[1] - p2[1]))
            if off not in offsets:
                offsets[off] = len(offsets)
            idxs.append(offsets[off])
    idxs = jnp.array(idxs, dtype=jnp.int32).reshape(N, N)
    attention_biases = nrm((num_head, len(offsets)))
    ab_full = attention_biases[:, idxs]                      # (num_head, N, N)
    params["ab"] = [ab_full[i] for i in range(num_head)]

    x = jax.random.normal(next(keys), (batch, embed_dim, resolution, resolution),
                          dtype=jnp.float32)

    out = local_window_attention(
        x, params, embed_dim=embed_dim, q_k_dim=q_k_dim, num_head=num_head,
        multi_v=multi_v, resolution=resolution,
        window_resolution=window_resolution, kernels=kernels)
    out = jax.block_until_ready(out)

    ref = local_window_attention_ref(
        x, params, embed_dim=embed_dim, q_k_dim=q_k_dim, num_head=num_head,
        multi_v=multi_v, resolution=resolution,
        window_resolution=window_resolution, kernels=kernels)

    assert out.shape == (batch, embed_dim, resolution, resolution), out.shape
    max_err = float(jnp.max(jnp.abs(out - ref)))
    assert jnp.allclose(out, ref, atol=2e-4, rtol=2e-4), max_err
    print("KERNEL_OK")
</pallas_src>

<mosaic_0001>
module attributes {stable_mosaic.version = 11 : i64} {
  func.func @_cga_kernel(%arg0: i32, %arg1: memref<1x16x32xf32, #tpu.memory_space<vmem>>, %arg2: memref<16x32xf32, #tpu.memory_space<vmem>>, %arg3: memref<1x32xf32, #tpu.memory_space<vmem>>, %arg4: memref<9x8xf32, #tpu.memory_space<vmem>>, %arg5: memref<1x8xf32, #tpu.memory_space<vmem>>, %arg6: memref<16x16xf32, #tpu.memory_space<vmem>>, %arg7: memref<16x32xf32, #tpu.memory_space<vmem>>, %arg8: memref<1x32xf32, #tpu.memory_space<vmem>>, %arg9: memref<25x8xf32, #tpu.memory_space<vmem>>, %arg10: memref<1x8xf32, #tpu.memory_space<vmem>>, %arg11: memref<16x16xf32, #tpu.memory_space<vmem>>, %arg12: memref<32x32xf32, #tpu.memory_space<vmem>>, %arg13: memref<1x32xf32, #tpu.memory_space<vmem>>, %arg14: memref<1x16x32xf32, #tpu.memory_space<vmem>>, %arg15: memref<36x8xf32, #tpu.memory_space<vmem>>) attributes {dimension_semantics = [#tpu.dimension_semantics<parallel>], iteration_bounds = array<i64: 8>, scalar_prefetch = 0 : i64, scratch_operands = 1 : i64, tpu.core_type = #tpu.core_type<tc>, window_params = [{transform_indices = @transform_0, window_bounds = array<i64: 1, 16, 32>}, {pipeline_mode = #tpu.pipeline_mode<synchronous>, transform_indices = @transform_1, window_bounds = array<i64: 16, 32>}, {pipeline_mode = #tpu.pipeline_mode<synchronous>, transform_indices = @transform_2, window_bounds = array<i64: 1, 32>}, {pipeline_mode = #tpu.pipeline_mode<synchronous>, transform_indices = @transform_3, window_bounds = array<i64: 9, 8>}, {pipeline_mode = #tpu.pipeline_mode<synchronous>, transform_indices = @transform_4, window_bounds = array<i64: 1, 8>}, {pipeline_mode = #tpu.pipeline_mode<synchronous>, transform_indices = @transform_5, window_bounds = array<i64: 16, 16>}, {pipeline_mode = #tpu.pipeline_mode<synchronous>, transform_indices = @transform_6, window_bounds = array<i64: 16, 32>}, {pipeline_mode = #tpu.pipeline_mode<synchronous>, transform_indices = @transform_7, window_bounds = array<i64: 1, 32>}, {pipeline_mode = #tpu.pipeline_mode<synchronous>, transform_indices = @transform_8, window_bounds = array<i64: 25, 8>}, {pipeline_mode = #tpu.pipeline_mode<synchronous>, transform_indices = @transform_9, window_bounds = array<i64: 1, 8>}, {pipeline_mode = #tpu.pipeline_mode<synchronous>, transform_indices = @transform_10, window_bounds = array<i64: 16, 16>}, {pipeline_mode = #tpu.pipeline_mode<synchronous>, transform_indices = @transform_11, window_bounds = array<i64: 32, 32>}, {pipeline_mode = #tpu.pipeline_mode<synchronous>, transform_indices = @transform_12, window_bounds = array<i64: 1, 32>}, {transform_indices = @transform_13, window_bounds = array<i64: 1, 16, 32>}]} {
    %c0 = arith.constant 0 : index
    %c0_0 = arith.constant 0 : index
    %c0_1 = arith.constant 0 : index
    %0 = vector.load %arg1[%c0, %c0_0, %c0_1] : memref<1x16x32xf32, #tpu.memory_space<vmem>>, vector<1x16x32xf32>
    %1 = vector.shape_cast %0 : vector<1x16x32xf32> to vector<16x32xf32>
    %cst = arith.constant 0.000000e+00 : f32
    %2 = vector.broadcast %cst : f32 to vector<36x8xf32>
    %c0_2 = arith.constant 0 : index
    %c0_3 = arith.constant 0 : index
    %3 = vector.load %arg15[%c0_2, %c0_3] : memref<36x8xf32, #tpu.memory_space<vmem>>, vector<36x8xf32>
    tpu.vector_store %arg15[%c0_2, %c0_3], %2 {strides = array<i32>} : memref<36x8xf32, #tpu.memory_space<vmem>>, vector<36x8xf32>,
    %4 = tpu.iota {dimensions = array<i32: 0>} : vector<16x1xi32>
    %c4_i32 = arith.constant 4 : i32
    %c0_i32 = arith.constant 0 : i32
    %5 = arith.cmpi eq, %c4_i32, %c0_i32 : i32
    %c1_i32 = arith.constant 1 : i32
    %6 = arith.select %5, %c1_i32, %c4_i32 : i32
    %7 = vector.broadcast %6 : i32 to vector<16x1xi32>
    %8 = arith.remsi %4, %7 : vector<16x1xi32>
    %c0_i32_4 = arith.constant 0 : i32
    %9 = vector.broadcast %c0_i32_4 : i32 to vector<16x1xi32>
    %10 = arith.cmpi ne, %8, %9 : vector<16x1xi32>
    %c0_i32_5 = arith.constant 0 : i32
    %11 = vector.broadcast %c0_i32_5 : i32 to vector<16x1xi32>
    %12 = arith.cmpi slt, %8, %11 : vector<16x1xi32>
    %c0_i32_6 = arith.constant 0 : i32
    %13 = arith.cmpi slt, %6, %c0_i32_6 : i32
    %14 = vector.broadcast %13 : i1 to vector<16x1xi1>
    %15 = vector.broadcast %14 : vector<16x1xi1> to vector<16x1xi1>
    %16 = arith.xori %12, %15 : vector<16x1xi1>
    %17 = arith.andi %16, %10 : vector<16x1xi1>
    %18 = vector.broadcast %6 : i32 to vector<16x1xi32>
    %19 = arith.addi %8, %18 : vector<16x1xi32>
    %20 = arith.select %17, %19, %8 : vector<16x1xi1>, vector<16x1xi32>
    %c-2_i32 = arith.constant -2 : i32
    %21 = vector.broadcast %c-2_i32 : i32 to vector<16x1xi32>
    %22 = arith.addi %20, %21 : vector<16x1xi32>
    %c0_i32_7 = arith.constant 0 : i32
    %23 = vector.broadcast %c0_i32_7 : i32 to vector<16x1xi32>
    %24 = arith.cmpi sge, %22, %23 : vector<16x1xi32>
    %c-2_i32_8 = arith.constant -2 : i32
    %25 = vector.broadcast %c-2_i32_8 : i32 to vector<16x1xi32>
    %26 = arith.addi %20, %25 : vector<16x1xi32>
    %c4_i32_9 = arith.constant 4 : i32
    %27 = vector.broadcast %c4_i32_9 : i32 to vector<16x1xi32>
    %28 = arith.cmpi slt, %26, %27 : vector<16x1xi32>
    %29 = arith.andi %24, %28 : vector<16x1xi1>
    %c-1_i32 = arith.constant -1 : i32
    %30 = vector.broadcast %c-1_i32 : i32 to vector<16x1xi32>
    %31 = arith.addi %20, %30 : vector<16x1xi32>
    %c0_i32_10 = arith.constant 0 : i32
    %32 = vector.broadcast %c0_i32_10 : i32 to vector<16x1xi32>
    %33 = arith.cmpi sge, %31, %32 : vector<16x1xi32>
    %c-1_i32_11 = arith.constant -1 : i32
    %34 = vector.broadcast %c-1_i32_11 : i32 to vector<16x1xi32>
    %35 = arith.addi %20, %34 : vector<16x1xi32>
    %c4_i32_12 = arith.constant 4 : i32
    %36 = vector.broadcast %c4_i32_12 : i32 to vector<16x1xi32>
    %37 = arith.cmpi slt, %35, %36 : vector<16x1xi32>
    %38 = arith.andi %33, %37 : vector<16x1xi1>
    %c1_i32_13 = arith.constant 1 : i32
    %39 = vector.broadcast %c1_i32_13 : i32 to vector<16x1xi32>
    %40 = arith.addi %20, %39 : vector<16x1xi32>
    %c0_i32_14 = arith.constant 0 : i32
    %41 = vector.broadcast %c0_i32_14 : i32 to vector<16x1xi32>
    %42 = arith.cmpi sge, %40, %41 : vector<16x1xi32>
    %c1_i32_15 = arith.constant 1 : i32
    %43 = vector.broadcast %c1_i32_15 : i32 to vector<16x1xi32>
    %44 = arith.addi %20, %43 : vector<16x1xi32>
    %c4_i32_16 = arith.constant 4 : i32
    %45 = vector.broadcast %c4_i32_16 : i32 to vector<16x1xi32>
    %46 = arith.cmpi slt, %44, %45 : vector<16x1xi32>
    %47 = arith.andi %42, %46 : vector<16x1xi1>
    %c2_i32 = arith.constant 2 : i32
    %48 = vector.broadcast %c2_i32 : i32 to vector<16x1xi32>
    %49 = arith.addi %20, %48 : vector<16x1xi32>
    %c0_i32_17 = arith.constant 0 : i32
    %50 = vector.broadcast %c0_i32_17 : i32 to vector<16x1xi32>
    %51 = arith.cmpi sge, %49, %50 : vector<16x1xi32>
    %c2_i32_18 = arith.constant 2 : i32
    %52 = vector.broadcast %c2_i32_18 : i32 to vector<16x1xi32>
    %53 = arith.addi %20, %52 : vector<16x1xi32>
    %c4_i32_19 = arith.constant 4 : i32
    %54 = vector.broadcast %c4_i32_19 : i32 to vector<16x1xi32>
    %55 = arith.cmpi slt, %53, %54 : vector<16x1xi32>
    %56 = arith.andi %51, %55 : vector<16x1xi1>
    %57 = vector.extract_strided_slice %1 {offsets = [0, 0], sizes = [16, 16], strides = [1, 1]} : vector<16x32xf32> to vector<16x16xf32>
    %c0_20 = arith.constant 0 : index
    %c0_21 = arith.constant 0 : index
    %58 = vector.load %arg2[%c0_20, %c0_21] : memref<16x32xf32, #tpu.memory_space<vmem>>, vector<16x32xf32>
    %cst_22 = arith.constant dense<0.000000e+00> : vector<16x32xf32>
    %59 = tpu.matmul %57, %58, %cst_22 {dimension_numbers = #tpu.dot_dimension_numbers<[1], [0], [0], [1], [0, 0, 1, 1], [], []>} : vector<16x16xf32>, vector<16x32xf32>, vector<16x32xf32> -> vector<16x32xf32>
    %c0_23 = arith.constant 0 : index
    %c0_24 = arith.constant 0 : index
    %60 = vector.load %arg3[%c0_23, %c0_24] : memref<1x32xf32, #tpu.memory_space<vmem>>, vector<1x32xf32>
    %61 = vector.broadcast %60 : vector<1x32xf32> to vector<16x32xf32>
    %62 = arith.addf %59, %61 : vector<16x32xf32>
    %63 = vector.extract_strided_slice %62 {offsets = [0, 0], sizes = [16, 8], strides = [1, 1]} : vector<16x32xf32> to vector<16x8xf32>
    %64 = vector.extract_strided_slice %62 {offsets = [0, 8], sizes = [16, 8], strides = [1, 1]} : vector<16x32xf32> to vector<16x8xf32>
    %65 = vector.extract_strided_slice %62 {offsets = [0, 16], sizes = [16, 16], strides = [1, 1]} : vector<16x32xf32> to vector<16x16xf32>
    %c10 = arith.constant 10 : index
    %c0_25 = arith.constant 0 : index
    %66 = vector.load %arg15[%c10, %c0_25] : memref<36x8xf32, #tpu.memory_space<vmem>>, vector<16x8xf32>
    tpu.vector_store %arg15[%c10, %c0_25], %63 {strides = array<i32>} : memref<36x8xf32, #tpu.memory_space<vmem>>, vector<16x8xf32>,
    %c0_26 = arith.constant 0 : index
    %c0_27 = arith.constant 0 : index
    %67 = vector.load %arg4[%c0_26, %c0_27] : memref<9x8xf32, #tpu.memory_space<vmem>>, vector<9x8xf32>
    %cst_28 = arith.constant 0.000000e+00 : f32
    %68 = vector.broadcast %cst_28 : f32 to vector<16x8xf32>
    %c5 = arith.constant 5 : index
    %c0_29 = arith.constant 0 : index
    %69 = vector.load %arg15[%c5, %c0_29] : memref<36x8xf32, #tpu.memory_space<vmem>>, vector<16x8xf32>
    %cst_30 = arith.constant 0.000000e+00 : f32
    %70 = vector.shape_cast %38 : vector<16x1xi1> to vector<16x1xi1>
    %71 = vector.broadcast %70 : vector<16x1xi1> to vector<16x8xi1>
    %72 = vector.broadcast %cst_30 : f32 to vector<16x8xf32>
    %73 = arith.select %71, %69, %72 : vector<16x8xi1>, vector<16x8xf32>
    %74 = vector.extract_strided_slice %67 {offsets = [0, 0], sizes = [1, 8], strides = [1, 1]} : vector<9x8xf32> to vector<1x8xf32>
    %75 = vector.broadcast %74 : vector<1x8xf32> to vector<16x8xf32>
    %76 = arith.mulf %73, %75 : vector<16x8xf32>
    %77 = arith.addf %68, %76 : vector<16x8xf32>
    %c6 = arith.constant 6 : index
    %c0_31 = arith.constant 0 : index
    %78 = vector.load %arg15[%c6, %c0_31] : memref<36x8xf32, #tpu.memory_space<vmem>>, vector<16x8xf32>
    %79 = vector.extract_strided_slice %67 {offsets = [1, 0], sizes = [1, 8], strides = [1, 1]} : vector<9x8xf32> to vector<1x8xf32>
    %80 = vector.broadcast %79 : vector<1x8xf32> to vector<16x8xf32>
    %81 = arith.mulf %78, %80 : vector<16x8xf32>
    %82 = arith.addf %77, %81 : vector<16x8xf32>
    %c7 = arith.constant 7 : index
    %c0_32 = arith.constant 0 : index
    %83 = vector.load %arg15[%c7, %c0_32] : memref<36x8xf32, #tpu.memory_space<vmem>>, vector<16x8xf32>
    %cst_33 = arith.constant 0.000000e+00 : f32
    %84 = vector.shape_cast %47 : vector<16x1xi1> to vector<16x1xi1>
    %85 = vector.broadcast %84 : vector<16x1xi1> to vector<16x8xi1>
    %86 = vector.broadcast %cst_33 : f32 to vector<16x8xf32>
    %87 = arith.select %85, %83, %86 : vector<16x8xi1>, vector<16x8xf32>
    %88 = vector.extract_strided_slice %67 {offsets = [2, 0], sizes = [1, 8], strides = [1, 1]} : vector<9x8xf32> to vector<1x8xf32>
    %89 = vector.broadcast %88 : vector<1x8xf32> to vector<16x8xf32>
    %90 = arith.mulf %87, %89 : vector<16x8xf32>
    %91 = arith.addf %82, %90 : vector<16x8xf32>
    %c9 = arith.constant 9 : index
    %c0_34 = arith.constant 0 : index
    %92 = vector.load %arg15[%c9, %c0_34] : memref<36x8xf32, #tpu.memory_space<vmem>>, vector<16x8xf32>
    %cst_35 = arith.constant 0.000000e+00 : f32
    %93 = vector.shape_cast %38 : vector<16x1xi1> to vector<16x1xi1>
    %94 = vector.broadcast %93 : vector<16x1xi1> to vector<16x8xi1>
    %95 = vector.broadcast %cst_35 : f32 to vector<16x8xf32>
    %96 = arith.select %94, %92, %95 : vector<16x8xi1>, vector<16x8xf32>
    %97 = vector.extract_strided_slice %67 {offsets = [3, 0], sizes = [1, 8], strides = [1, 1]} : vector<9x8xf32> to vector<1x8xf32>
    %98 = vector.broadcast %97 : vector<1x8xf32> to vector<16x8xf32>
    %99 = arith.mulf %96, %98 : vector<16x8xf32>
    %100 = arith.addf %91, %99 : vector<16x8xf32>
    %c10_36 = arith.constant 10 : index
    %c0_37 = arith.constant 0 : index
    %101 = vector.load %arg15[%c10_36, %c0_37] : memref<36x8xf32, #tpu.memory_space<vmem>>, vector<16x8xf32>
    %102 = vector.extract_strided_slice %67 {offsets = [4, 0], sizes = [1, 8], strides = [1, 1]} : vector<9x8xf32> to vector<1x8xf32>
    %103 = vector.broadcast %102 : vector<1x8xf32> to vector<16x8xf32>
    %104 = arith.mulf %101, %103 : vector<16x8xf32>
    %105 = arith.addf %100, %104 : vector<16x8xf32>
    %c11 = arith.constant 11 : index
    %c0_38 = arith.constant 0 : index
    %106 = vector.load %arg15[%c11, %c0_38] : memref<36x8xf32, #tpu.memory_space<vmem>>, vector<16x8xf32>
    %cst_39 = arith.constant 0.000000e+00 : f32
    %107 = vector.shape_cast %47 : vector<16x1xi1> to vector<16x1xi1>
    %108 = vector.broadcast %107 : vector<16x1xi1> to vector<16x8xi1>
    %109 = vector.broadcast %cst_39 : f32 to vector<16x8xf32>
    %110 = arith.select %108, %106, %109 : vector<16x8xi1>, vector<16x8xf32>
    %111 = vector.extract_strided_slice %67 {offsets = [5, 0], sizes = [1, 8], strides = [1, 1]} : vector<9x8xf32> to vector<1x8xf32>
    %112 = vector.broadcast %111 : vector<1x8xf32> to vector<16x8xf32>
    %113 = arith.mulf %110, %112 : vector<16x8xf32>
    %114 = arith.addf %105, %113 : vector<16x8xf32>
    %c13 = arith.constant 13 : index
    %c0_40 = arith.constant 0 : index
    %115 = vector.load %arg15[%c13, %c0_40] : memref<36x8xf32, #tpu.memory_space<vmem>>, vector<16x8xf32>
    %cst_41 = arith.constant 0.000000e+00 : f32
    %116 = vector.shape_cast %38 : vector<16x1xi1> to vector<16x1xi1>
    %117 = vector.broadcast %116 : vector<16x1xi1> to vector<16x8xi1>
    %118 = vector.broadcast %cst_41 : f32 to vector<16x8xf32>
    %119 = arith.select %117, %115, %118 : vector<16x8xi1>, vector<16x8xf32>
    %120 = vector.extract_strided_slice %67 {offsets = [6, 0], sizes = [1, 8], strides = [1, 1]} : vector<9x8xf32> to vector<1x8xf32>
    %121 = vector.broadcast %120 : vector<1x8xf32> to vector<16x8xf32>
    %122 = arith.mulf %119, %121 : vector<16x8xf32>
    %123 = arith.addf %114, %122 : vector<16x8xf32>
    %c14 = arith.constant 14 : index
    %c0_42 = arith.constant 0 : index
    %124 = vector.load %arg15[%c14, %c0_42] : memref<36x8xf32, #tpu.memory_space<vmem>>, vector<16x8xf32>
    %125 = vector.extract_strided_slice %67 {offsets = [7, 0], sizes = [1, 8], strides = [1, 1]} : vector<9x8xf32> to vector<1x8xf32>
    %126 = vector.broadcast %125 : vector<1x8xf32> to vector<16x8xf32>
    %127 = arith.mulf %124, %126 : vector<16x8xf32>
    %128 = arith.addf %123, %127 : vector<16x8xf32>
    %c15 = arith.constant 15 : index
    %c0_43 = arith.constant 0 : index
    %129 = vector.load %arg15[%c15, %c0_43] : memref<36x8xf32, #tpu.memory_space<vmem>>, vector<16x8xf32>
    %cst_44 = arith.constant 0.000000e+00 : f32
    %130 = vector.shape_cast %47 : vector<16x1xi1> to vector<16x1xi1>
    %131 = vector.broadcast %130 : vector<16x1xi1> to vector<16x8xi1>
    %132 = vector.broadcast %cst_44 : f32 to vector<16x8xf32>
    %133 = arith.select %131, %129, %132 : vector<16x8xi1>, vector<16x8xf32>
    %134 = vector.extract_strided_slice %67 {offsets = [8, 0], sizes = [1, 8], strides = [1, 1]} : vector<9x8xf32> to vector<1x8xf32>
    %135 = vector.broadcast %134 : vector<1x8xf32> to vector<16x8xf32>
    %136 = arith.mulf %133, %135 : vector<16x8xf32>
    %137 = arith.addf %128, %136 : vector<16x8xf32>
    %c0_45 = arith.constant 0 : index
    %c0_46 = arith.constant 0 : index
    %138 = vector.load %arg5[%c0_45, %c0_46] : memref<1x8xf32, #tpu.memory_space<vmem>>, vector<1x8xf32>
    %139 = vector.broadcast %138 : vector<1x8xf32> to vector<16x8xf32>
    %140 = arith.addf %137, %139 : vector<16x8xf32>
    %cst_47 = arith.constant dense<0.000000e+00> : vector<16x16xf32>
    %141 = tpu.matmul %140, %64, %cst_47 {dimension_numbers = #tpu.dot_dimension_numbers<[1], [1], [0], [0], [0, 0, 1, 0], [], []>} : vector<16x8xf32>, vector<16x8xf32>, vector<16x16xf32> -> vector<16x16xf32>
    %cst_48 = arith.constant 0.353553385 : f32
    %142 = vector.broadcast %cst_48 : f32 to vector<16x16xf32>
    %143 = arith.mulf %141, %142 : vector<16x16xf32>
    %c0_49 = arith.constant 0 : index
    %c0_50 = arith.constant 0 : index
    %144 = vector.load %arg6[%c0_49, %c0_50] : memref<16x16xf32, #tpu.memory_space<vmem>>, vector<16x16xf32>
    %145 = arith.addf %143, %144 : vector<16x16xf32>
    %cst_51 = arith.constant dense<0xFF800000> : vector<16xf32>
    %146 = vector.multi_reduction <maximumf>, %145, %cst_51 [1] : vector<16x16xf32> to vector<16xf32>
    %147 = vector.shape_cast %146 : vector<16xf32> to vector<16x1xf32>
    %148 = vector.broadcast %147 : vector<16x1xf32> to vector<16x16xf32>
    %149 = arith.subf %145, %148 : vector<16x16xf32>
    %150 = math.exp %149 : vector<16x16xf32>
    %cst_52 = arith.constant dense<0.000000e+00> : vector<16xf32>
    %151 = vector.multi_reduction <add>, %150, %cst_52 [1] : vector<16x16xf32> to vector<16xf32>
    %152 = vector.shape_cast %151 : vector<16xf32> to vector<16x1xf32>
    %153 = vector.broadcast %152 : vector<16x1xf32> to vector<16x16xf32>
    %154 = arith.divf %150, %153 : vector<16x16xf32>
    %cst_53 = arith.constant dense<0.000000e+00> : vector<16x16xf32>
    %155 = tpu.matmul %154, %65, %cst_53 {dimension_numbers = #tpu.dot_dimension_numbers<[1], [0], [0], [1], [0, 0, 1, 1], [], []>} : vector<16x16xf32>, vector<16x16xf32>, vector<16x16xf32> -> vector<16x16xf32>
    %156 = vector.extract_strided_slice %1 {offsets = [0, 16], sizes = [16, 16], strides = [1, 1]} : vector<16x32xf32> to vector<16x16xf32>
    %157 = arith.addf %155, %156 : vector<16x16xf32>
    %c0_54 = arith.constant 0 : index
    %c0_55 = arith.constant 0 : index
    %158 = vector.load %arg7[%c0_54, %c0_55] : memref<16x32xf32, #tpu.memory_space<vmem>>, vector<16x32xf32>
    %cst_56 = arith.constant dense<0.000000e+00> : vector<16x32xf32>
    %159 = tpu.matmul %157, %158, %cst_56 {dimension_numbers = #tpu.dot_dimension_numbers<[1], [0], [0], [1], [0, 0, 1, 1], [], []>} : vector<16x16xf32>, vector<16x32xf32>, vector<16x32xf32> -> vector<16x32xf32>
    %c0_57 = arith.constant 0 : index
    %c0_58 = arith.constant 0 : index
    %160 = vector.load %arg8[%c0_57, %c0_58] : memref<1x32xf32, #tpu.memory_space<vmem>>, vector<1x32xf32>
    %161 = vector.broadcast %160 : vector<1x32xf32> to vector<16x32xf32>
    %162 = arith.addf %159, %161 : vector<16x32xf32>
    %163 = vector.extract_strided_slice %162 {offsets = [0, 0], sizes = [16, 8], strides = [1, 1]} : vector<16x32xf32> to vector<16x8xf32>
    %164 = vector.extract_strided_slice %162 {offsets = [0, 8], sizes = [16, 8], strides = [1, 1]} : vector<16x32xf32> to vector<16x8xf32>
    %165 = vector.extract_strided_slice %162 {offsets = [0, 16], sizes = [16, 16], strides = [1, 1]} : vector<16x32xf32> to vector<16x16xf32>
    %c10_59 = arith.constant 10 : index
    %c0_60 = arith.constant 0 : index
    %166 = vector.load %arg15[%c10_59, %c0_60] : memref<36x8xf32, #tpu.memory_space<vmem>>, vector<16x8xf32>
    tpu.vector_store %arg15[%c10_59, %c0_60], %163 {strides = array<i32>} : memref<36x8xf32, #tpu.memory_space<vmem>>, vector<16x8xf32>,
    %c0_61 = arith.constant 0 : index
    %c0_62 = arith.constant 0 : index
    %167 = vector.load %arg9[%c0_61, %c0_62] : memref<25x8xf32, #tpu.memory_space<vmem>>, vector<25x8xf32>
    %cst_63 = arith.constant 0.000000e+00 : f32
    %168 = vector.broadcast %cst_63 : f32 to vector<16x8xf32>
    %c0_64 = arith.constant 0 : index
    %c0_65 = arith.constant 0 : index
    %169 = vector.load %arg15[%c0_64, %c0_65] : memref<36x8xf32, #tpu.memory_space<vmem>>, vector<16x8xf32>
    %cst_66 = arith.constant 0.000000e+00 : f32
    %170 = vector.shape_cast %29 : vector<16x1xi1> to vector<16x1xi1>
    %171 = vector.broadcast %170 : vector<16x1xi1> to vector<16x8xi1>
    %172 = vector.broadcast %cst_66 : f32 to vector<16x8xf32>
    %173 = arith.select %171, %169, %172 : vector<16x8xi1>, vector<16x8xf32>
    %174 = vector.extract_strided_slice %167 {offsets = [0, 0], sizes = [1, 8], strides = [1, 1]} : vector<25x8xf32> to vector<1x8xf32>
    %175 = vector.broadcast %174 : vector<1x8xf32> to vector<16x8xf32>
    %176 = arith.mulf %173, %175 : vector<16x8xf32>
    %177 = arith.addf %168, %176 : vector<16x8xf32>
    %c1 = arith.constant 1 : index
    %c0_67 = arith.constant 0 : index
    %178 = vector.load %arg15[%c1, %c0_67] : memref<36x8xf32, #tpu.memory_space<vmem>>, vector<16x8xf32>
    %cst_68 = arith.constant 0.000000e+00 : f32
    %179 = vector.shape_cast %38 : vector<16x1xi1> to vector<16x1xi1>
    %180 = vector.broadcast %179 : vector<16x1xi1> to vector<16x8xi1>
    %181 = vector.broadcast %cst_68 : f32 to vector<16x8xf32>
    %182 = arith.select %180, %178, %181 : vector<16x8xi1>, vector<16x8xf32>
    %183 = vector.extract_strided_slice %167 {offsets = [1, 0], sizes = [1, 8], strides = [1, 1]} : vector<25x8xf32> to vector<1x8xf32>
    %184 = vector.broadcast %183 : vector<1x8xf32> to vector<16x8xf32>
    %185 = arith.mulf %182, %184 : vector<16x8xf32>
    %186 = arith.addf %177, %185 : vector<16x8xf32>
    %c2 = arith.constant 2 : index
    %c0_69 = arith.constant 0 : index
    %187 = vector.load %arg15[%c2, %c0_69] : memref<36x8xf32, #tpu.memory_space<vmem>>, vector<16x8xf32>
    %188 = vector.extract_strided_slice %167 {offsets = [2, 0], sizes = [1, 8], strides = [1, 1]} : vector<25x8xf32> to vector<1x8xf32>
    %189 = vector.broadcast %188 : vector<1x8xf32> to vector<16x8xf32>
    %190 = arith.mulf %187, %189 : vector<16x8xf32>
    %191 = arith.addf %186, %190 : vector<16x8xf32>
    %c3 = arith.constant 3 : index
    %c0_70 = arith.constant 0 : index
    %192 = vector.load %arg15[%c3, %c0_70] : memref<36x8xf32, #tpu.memory_space<vmem>>, vector<16x8xf32>
    %cst_71 = arith.constant 0.000000e+00 : f32
    %193 = vector.shape_cast %47 : vector<16x1xi1> to vector<16x1xi1>
    %194 = vector.broadcast %193 : vector<16x1xi1> to vector<16x8xi1>
    %195 = vector.broadcast %cst_71 : f32 to vector<16x8xf32>
    %196 = arith.select %194, %192, %195 : vector<16x8xi1>, vector<16x8xf32>
    %197 = vector.extract_strided_slice %167 {offsets = [3, 0], sizes = [1, 8], strides = [1, 1]} : vector<25x8xf32> to vector<1x8xf32>
    %198 = vector.broadcast %197 : vector<1x8xf32> to vector<16x8xf32>
    %199 = arith.mulf %196, %198 : vector<16x8xf32>
    %200 = arith.addf %191, %199 : vector<16x8xf32>
    %c4 = arith.constant 4 : index
    %c0_72 = arith.constant 0 : index
    %201 = vector.load %arg15[%c4, %c0_72] : memref<36x8xf32, #tpu.memory_space<vmem>>, vector<16x8xf32>
    %cst_73 = arith.constant 0.000000e+00 : f32
    %202 = vector.shape_cast %56 : vector<16x1xi1> to vector<16x1xi1>
    %203 = vector.broadcast %202 : vector<16x1xi1> to vector<16x8xi1>
    %204 = vector.broadcast %cst_73 : f32 to vector<16x8xf32>
    %205 = arith.select %203, %201, %204 : vector<16x8xi1>, vector<16x8xf32>
    %206 = vector.extract_strided_slice %167 {offsets = [4, 0], sizes = [1, 8], strides = [1, 1]} : vector<25x8xf32> to vector<1x8xf32>
    %207 = vector.broadcast %206 : vector<1x8xf32> to vector<16x8xf32>
    %208 = arith.mulf %205, %207 : vector<16x8xf32>
    %209 = arith.addf %200, %208 : vector<16x8xf32>
    %c4_74 = arith.constant 4 : index
    %c0_75 = arith.constant 0 : index
    %210 = vector.load %arg15[%c4_74, %c0_75] : memref<36x8xf32, #tpu.memory_space<vmem>>, vector<16x8xf32>
    %cst_76 = arith.constant 0.000000e+00 : f32
    %211 = vector.shape_cast %29 : vector<16x1xi1> to vector<16x1xi1>
    %212 = vector.broadcast %211 : vector<16x1xi1> to vector<16x8xi1>
    %213 = vector.broadcast %cst_76 : f32 to vector<16x8xf32>
    %214 = arith.select %212, %210, %213 : vector<16x8xi1>, vector<16x8xf32>
    %215 = vector.extract_strided_slice %167 {offsets = [5, 0], sizes = [1, 8], strides = [1, 1]} : vector<25x8xf32> to vector<1x8xf32>
    %216 = vector.broadcast %215 : vector<1x8xf32> to vector<16x8xf32>
    %217 = arith.mulf %214, %216 : vector<16x8xf32>
    %218 = arith.addf %209, %217 : vector<16x8xf32>
    %c5_77 = arith.constant 5 : index
    %c0_78 = arith.constant 0 : index
    %219 = vector.load %arg15[%c5_77, %c0_78] : memref<36x8xf32, #tpu.memory_space<vmem>>, vector<16x8xf32>
    %cst_79 = arith.constant 0.000000e+00 : f32
    %220 = vector.shape_cast %38 : vector<16x1xi1> to vector<16x1xi1>
    %221 = vector.broadcast %220 : vector<16x1xi1> to vector<16x8xi1>
    %222 = vector.broadcast %cst_79 : f32 to vector<16x8xf32>
    %223 = arith.select %221, %219, %222 : vector<16x8xi1>, vector<16x8xf32>
    %224 = vector.extract_strided_slice %167 {offsets = [6, 0], sizes = [1, 8], strides = [1, 1]} : vector<25x8xf32> to vector<1x8xf32>
    %225 = vector.broadcast %224 : vector<1x8xf32> to vector<16x8xf32>
    %226 = arith.mulf %223, %225 : vector<16x8xf32>
    %227 = arith.addf %218, %226 : vector<16x8xf32>
    %c6_80 = arith.constant 6 : index
    %c0_81 = arith.constant 0 : index
    %228 = vector.load %arg15[%c6_80, %c0_81] : memref<36x8xf32, #tpu.memory_space<vmem>>, vector<16x8xf32>
    %229 = vector.extract_strided_slice %167 {offsets = [7, 0], sizes = [1, 8], strides = [1, 1]} : vector<25x8xf32> to vector<1x8xf32>
    %230 = vector.broadcast %229 : vector<1x8xf32> to vector<16x8xf32>
    %231 = arith.mulf %228, %230 : vector<16x8xf32>
    %232 = arith.addf %227, %231 : vector<16x8xf32>
    %c7_82 = arith.constant 7 : index
    %c0_83 = arith.constant 0 : index
    %233 = vector.load %arg15[%c7_82, %c0_83] : memref<36x8xf32, #tpu.memory_space<vmem>>, vector<16x8xf32>
    %cst_84 = arith.constant 0.000000e+00 : f32
    %234 = vector.shape_cast %47 : vector<16x1xi1> to vector<16x1xi1>
    %235 = vector.broadcast %234 : vector<16x1xi1> to vector<16x8xi1>
    %236 = vector.broadcast %cst_84 : f32 to vector<16x8xf32>
    %237 = arith.select %235, %233, %236 : vector<16x8xi1>, vector<16x8xf32>
    %238 = vector.extract_strided_slice %167 {offsets = [8, 0], sizes = [1, 8], strides = [1, 1]} : vector<25x8xf32> to vector<1x8xf32>
    %239 = vector.broadcast %238 : vector<1x8xf32> to vector<16x8xf32>
    %240 = arith.mulf %237, %239 : vector<16x8xf32>
    %241 = arith.addf %232, %240 : vector<16x8xf32>
    %c8 = arith.constant 8 : index
    %c0_85 = arith.constant 0 : index
    %242 = vector.load %arg15[%c8, %c0_85] : memref<36x8xf32, #tpu.memory_space<vmem>>, vector<16x8xf32>
    %cst_86 = arith.constant 0.000000e+00 : f32
    %243 = vector.shape_cast %56 : vector<16x1xi1> to vector<16x1xi1>
    %244 = vector.broadcast %243 : vector<16x1xi1> to vector<16x8xi1>
    %245 = vector.broadcast %cst_86 : f32 to vector<16x8xf32>
    %246 = arith.select %244, %242, %245 : vector<16x8xi1>, vector<16x8xf32>
    %247 = vector.extract_strided_slice %167 {offsets = [9, 0], sizes = [1, 8], strides = [1, 1]} : vector<25x8xf32> to vector<1x8xf32>
    %248 = vector.broadcast %247 : vector<1x8xf32> to vector<16x8xf32>
    %249 = arith.mulf %246, %248 : vector<16x8xf32>
    %250 = arith.addf %241, %249 : vector<16x8xf32>
    %c8_87 = arith.constant 8 : index
    %c0_88 = arith.constant 0 : index
    %251 = vector.load %arg15[%c8_87, %c0_88] : memref<36x8xf32, #tpu.memory_space<vmem>>, vector<16x8xf32>
    %cst_89 = arith.constant 0.000000e+00 : f32
    %252 = vector.shape_cast %29 : vector<16x1xi1> to vector<16x1xi1>
    %253 = vector.broadcast %252 : vector<16x1xi1> to vector<16x8xi1>
    %254 = vector.broadcast %cst_89 : f32 to vector<16x8xf32>
    %255 = arith.select %253, %251, %254 : vector<16x8xi1>, vector<16x8xf32>
    %256 = vector.extract_strided_slice %167 {offsets = [10, 0], sizes = [1, 8], strides = [1, 1]} : vector<25x8xf32> to vector<1x8xf32>
    %257 = vector.broadcast %256 : vector<1x8xf32> to vector<16x8xf32>
    %258 = arith.mulf %255, %257 : vector<16x8xf32>
    %259 = arith.addf %250, %258 : vector<16x8xf32>
    %c9_90 = arith.constant 9 : index
    %c0_91 = arith.constant 0 : index
    %260 = vector.load %arg15[%c9_90, %c0_91] : memref<36x8xf32, #tpu.memory_space<vmem>>, vector<16x8xf32>
    %cst_92 = arith.constant 0.000000e+00 : f32
    %261 = vector.shape_cast %38 : vector<16x1xi1> to vector<16x1xi1>
    %262 = vector.broadcast %261 : vector<16x1xi1> to vector<16x8xi1>
    %263 = vector.broadcast %cst_92 : f32 to vector<16x8xf32>
    %264 = arith.select %262, %260, %263 : vector<16x8xi1>, vector<16x8xf32>
    %265 = vector.extract_strided_slice %167 {offsets = [11, 0], sizes = [1, 8], strides = [1, 1]} : vector<25x8xf32> to vector<1x8xf32>
    %266 = vector.broadcast %265 : vector<1x8xf32> to vector<16x8xf32>
    %267 = arith.mulf %264, %266 : vector<16x8xf32>
    %268 = arith.addf %259, %267 : vector<16x8xf32>
    %c10_93 = arith.constant 10 : index
    %c0_94 = arith.constant 0 : index
    %269 = vector.load %arg15[%c10_93, %c0_94] : memref<36x8xf32, #tpu.memory_space<vmem>>, vector<16x8xf32>
    %270 = vector.extract_strided_slice %167 {offsets = [12, 0], sizes = [1, 8], strides = [1, 1]} : vector<25x8xf32> to vector<1x8xf32>
    %271 = vector.broadcast %270 : vector<1x8xf32> to vector<16x8xf32>
    %272 = arith.mulf %269, %271 : vector<16x8xf32>
    %273 = arith.addf %268, %272 : vector<16x8xf32>
    %c11_95 = arith.constant 11 : index
    %c0_96 = arith.constant 0 : index
    %274 = vector.load %arg15[%c11_95, %c0_96] : memref<36x8xf32, #tpu.memory_space<vmem>>, vector<16x8xf32>
    %cst_97 = arith.constant 0.000000e+00 : f32
    %275 = vector.shape_cast %47 : vector<16x1xi1> to vector<16x1xi1>
    %276 = vector.broadcast %275 : vector<16x1xi1> to vector<16x8xi1>
    %277 = vector.broadcast %cst_97 : f32 to vector<16x8xf32>
    %278 = arith.select %276, %274, %277 : vector<16x8xi1>, vector<16x8xf32>
    %279 = vector.extract_strided_slice %167 {offsets = [13, 0], sizes = [1, 8], strides = [1, 1]} : vector<25x8xf32> to vector<1x8xf32>
    %280 = vector.broadcast %279 : vector<1x8xf32> to vector<16x8xf32>
    %281 = arith.mulf %278, %280 : vector<16x8xf32>
    %282 = arith.addf %273, %281 : vector<16x8xf32>
    %c12 = arith.constant 12 : index
    %c0_98 = arith.constant 0 : index
    %283 = vector.load %arg15[%c12, %c0_98] : memref<36x8xf32, #tpu.memory_space<vmem>>, vector<16x8xf32>
    %cst_99 = arith.constant 0.000000e+00 : f32
    %284 = vector.shape_cast %56 : vector<16x1xi1> to vector<16x1xi1>
    %285 = vector.broadcast %284 : vector<16x1xi1> to vector<16x8xi1>
    %286 = vector.broadcast %cst_99 : f32 to vector<16x8xf32>
    %287 = arith.select %285, %283, %286 : vector<16x8xi1>, vector<16x8xf32>
    %288 = vector.extract_strided_slice %167 {offsets = [14, 0], sizes = [1, 8], strides = [1, 1]} : vector<25x8xf32> to vector<1x8xf32>
    %289 = vector.broadcast %288 : vector<1x8xf32> to vector<16x8xf32>
    %290 = arith.mulf %287, %289 : vector<16x8xf32>
    %291 = arith.addf %282, %290 : vector<16x8xf32>
    %c12_100 = arith.constant 12 : index
    %c0_101 = arith.constant 0 : index
    %292 = vector.load %arg15[%c12_100, %c0_101] : memref<36x8xf32, #tpu.memory_space<vmem>>, vector<16x8xf32>
    %cst_102 = arith.constant 0.000000e+00 : f32
    %293 = vector.shape_cast %29 : vector<16x1xi1> to vector<16x1xi1>
    %294 = vector.broadcast %293 : vector<16x1xi1> to vector<16x8xi1>
    %295 = vector.broadcast %cst_102 : f32 to vector<16x8xf32>
    %296 = arith.select %294, %292, %295 : vector<16x8xi1>, vector<16x8xf32>
    %297 = vector.extract_strided_slice %167 {offsets = [15, 0], sizes = [1, 8], strides = [1, 1]} : vector<25x8xf32> to vector<1x8xf32>
    %298 = vector.broadcast %297 : vector<1x8xf32> to vector<16x8xf32>
    %299 = arith.mulf %296, %298 : vector<16x8xf32>
    %300 = arith.addf %291, %299 : vector<16x8xf32>
    %c13_103 = arith.constant 13 : index
    %c0_104 = arith.constant 0 : index
    %301 = vector.load %arg15[%c13_103, %c0_104] : memref<36x8xf32, #tpu.memory_space<vmem>>, vector<16x8xf32>
    %cst_105 = arith.constant 0.000000e+00 : f32
    %302 = vector.shape_cast %38 : vector<16x1xi1> to vector<16x1xi1>
    %303 = vector.broadcast %302 : vector<16x1xi1> to vector<16x8xi1>
    %304 = vector.broadcast %cst_105 : f32 to vector<16x8xf32>
    %305 = arith.select %303, %301, %304 : vector<16x8xi1>, vector<16x8xf32>
    %306 = vector.extract_strided_slice %167 {offsets = [16, 0], sizes = [1, 8], strides = [1, 1]} : vector<25x8xf32> to vector<1x8xf32>
    %307 = vector.broadcast %306 : vector<1x8xf32> to vector<16x8xf32>
    %308 = arith.mulf %305, %307 : vector<16x8xf32>
    %309 = arith.addf %300, %308 : vector<16x8xf32>
    %c14_106 = arith.constant 14 : index
    %c0_107 = arith.constant 0 : index
    %310 = vector.load %arg15[%c14_106, %c0_107] : memref<36x8xf32, #tpu.memory_space<vmem>>, vector<16x8xf32>
    %311 = vector.extract_strided_slice %167 {offsets = [17, 0], sizes = [1, 8], strides = [1, 1]} : vector<25x8xf32> to vector<1x8xf32>
    %312 = vector.broadcast %311 : vector<1x8xf32> to vector<16x8xf32>
    %313 = arith.mulf %310, %312 : vector<16x8xf32>
    %314 = arith.addf %309, %313 : vector<16x8xf32>
    %c15_108 = arith.constant 15 : index
    %c0_109 = arith.constant 0 : index
    %315 = vector.load %arg15[%c15_108, %c0_109] : memref<36x8xf32, #tpu.memory_space<vmem>>, vector<16x8xf32>
    %cst_110 = arith.constant 0.000000e+00 : f32
    %316 = vector.shape_cast %47 : vector<16x1xi1> to vector<16x1xi1>
    %317 = vector.broadcast %316 : vector<16x1xi1> to vector<16x8xi1>
    %318 = vector.broadcast %cst_110 : f32 to vector<16x8xf32>
    %319 = arith.select %317, %315, %318 : vector<16x8xi1>, vector<16x8xf32>
    %320 = vector.extract_strided_slice %167 {offsets = [18, 0], sizes = [1, 8], strides = [1, 1]} : vector<25x8xf32> to vector<1x8xf32>
    %321 = vector.broadcast %320 : vector<1x8xf32> to vector<16x8xf32>
    %322 = arith.mulf %319, %321 : vector<16x8xf32>
    %323 = arith.addf %314, %322 : vector<16x8xf32>
    %c16 = arith.constant 16 : index
    %c0_111 = arith.constant 0 : index
    %324 = vector.load %arg15[%c16, %c0_111] : memref<36x8xf32, #tpu.memory_space<vmem>>, vector<16x8xf32>
    %cst_112 = arith.constant 0.000000e+00 : f32
    %325 = vector.shape_cast %56 : vector<16x1xi1> to vector<16x1xi1>
    %326 = vector.broadcast %325 : vector<16x1xi1> to vector<16x8xi1>
    %327 = vector.broadcast %cst_112 : f32 to vector<16x8xf32>
    %328 = arith.select %326, %324, %327 : vector<16x8xi1>, vector<16x8xf32>
    %329 = vector.extract_strided_slice %167 {offsets = [19, 0], sizes = [1, 8], strides = [1, 1]} : vector<25x8xf32> to vector<1x8xf32>
    %330 = vector.broadcast %329 : vector<1x8xf32> to vector<16x8xf32>
    %331 = arith.mulf %328, %330 : vector<16x8xf32>
    %332 = arith.addf %323, %331 : vector<16x8xf32>
    %c16_113 = arith.constant 16 : index
    %c0_114 = arith.constant 0 : index
    %333 = vector.load %arg15[%c16_113, %c0_114] : memref<36x8xf32, #tpu.memory_space<vmem>>, vector<16x8xf32>
    %cst_115 = arith.constant 0.000000e+00 : f32
    %334 = vector.shape_cast %29 : vector<16x1xi1> to vector<16x1xi1>
    %335 = vector.broadcast %334 : vector<16x1xi1> to vector<16x8xi1>
    %336 = vector.broadcast %cst_115 : f32 to vector<16x8xf32>
    %337 = arith.select %335, %333, %336 : vector<16x8xi1>, vector<16x8xf32>
    %338 = vector.extract_strided_slice %167 {offsets = [20, 0], sizes = [1, 8], strides = [1, 1]} : vector<25x8xf32> to vector<1x8xf32>
    %339 = vector.broadcast %338 : vector<1x8xf32> to vector<16x8xf32>
    %340 = arith.mulf %337, %339 : vector<16x8xf32>
    %341 = arith.addf %332, %340 : vector<16x8xf32>
    %c17 = arith.constant 17 : index
    %c0_116 = arith.constant 0 : index
    %342 = vector.load %arg15[%c17, %c0_116] : memref<36x8xf32, #tpu.memory_space<vmem>>, vector<16x8xf32>
    %cst_117 = arith.constant 0.000000e+00 : f32
    %343 = vector.shape_cast %38 : vector<16x1xi1> to vector<16x1xi1>
    %344 = vector.broadcast %343 : vector<16x1xi1> to vector<16x8xi1>
    %345 = vector.broadcast %cst_117 : f32 to vector<16x8xf32>
    %346 = arith.select %344, %342, %345 : vector<16x8xi1>, vector<16x8xf32>
    %347 = vector.extract_strided_slice %167 {offsets = [21, 0], sizes = [1, 8], strides = [1, 1]} : vector<25x8xf32> to vector<1x8xf32>
    %348 = vector.broadcast %347 : vector<1x8xf32> to vector<16x8xf32>
    %349 = arith.mulf %346, %348 : vector<16x8xf32>
    %350 = arith.addf %341, %349 : vector<16x8xf32>
    %c18 = arith.constant 18 : index
    %c0_118 = arith.constant 0 : index
    %351 = vector.load %arg15[%c18, %c0_118] : memref<36x8xf32, #tpu.memory_space<vmem>>, vector<16x8xf32>
    %352 = vector.extract_strided_slice %167 {offsets = [22, 0], sizes = [1, 8], strides = [1, 1]} : vector<25x8xf32> to vector<1x8xf32>
    %353 = vector.broadcast %352 : vector<1x8xf32> to vector<16x8xf32>
    %354 = arith.mulf %351, %353 : vector<16x8xf32>
    %355 = arith.addf %350, %354 : vector<16x8xf32>
    %c19 = arith.constant 19 : index
    %c0_119 = arith.constant 0 : index
    %356 = vector.load %arg15[%c19, %c0_119] : memref<36x8xf32, #tpu.memory_space<vmem>>, vector<16x8xf32>
    %cst_120 = arith.constant 0.000000e+00 : f32
    %357 = vector.shape_cast %47 : vector<16x1xi1> to vector<16x1xi1>
    %358 = vector.broadcast %357 : vector<16x1xi1> to vector<16x8xi1>
    %359 = vector.broadcast %cst_120 : f32 to vector<16x8xf32>
    %360 = arith.select %358, %356, %359 : vector<16x8xi1>, vector<16x8xf32>
    %361 = vector.extract_strided_slice %167 {offsets = [23, 0], sizes = [1, 8], strides = [1, 1]} : vector<25x8xf32> to vector<1x8xf32>
    %362 = vector.broadcast %361 : vector<1x8xf32> to vector<16x8xf32>
    %363 = arith.mulf %360, %362 : vector<16x8xf32>
    %364 = arith.addf %355, %363 : vector<16x8xf32>
    %c20 = arith.constant 20 : index
    %c0_121 = arith.constant 0 : index
    %365 = vector.load %arg15[%c20, %c0_121] : memref<36x8xf32, #tpu.memory_space<vmem>>, vector<16x8xf32>
    %cst_122 = arith.constant 0.000000e+00 : f32
    %366 = vector.shape_cast %56 : vector<16x1xi1> to vector<16x1xi1>
    %367 = vector.broadcast %366 : vector<16x1xi1> to vector<16x8xi1>
    %368 = vector.broadcast %cst_122 : f32 to vector<16x8xf32>
    %369 = arith.select %367, %365, %368 : vector<16x8xi1>, vector<16x8xf32>
    %370 = vector.extract_strided_slice %167 {offsets = [24, 0], sizes = [1, 8], strides = [1, 1]} : vector<25x8xf32> to vector<1x8xf32>
    %371 = vector.broadcast %370 : vector<1x8xf32> to vector<16x8xf32>
    %372 = arith.mulf %369, %371 : vector<16x8xf32>
    %373 = arith.addf %364, %372 : vector<16x8xf32>
    %c0_123 = arith.constant 0 : index
    %c0_124 = arith.constant 0 : index
    %374 = vector.load %arg10[%c0_123, %c0_124] : memref<1x8xf32, #tpu.memory_space<vmem>>, vector<1x8xf32>
    %375 = vector.broadcast %374 : vector<1x8xf32> to vector<16x8xf32>
    %376 = arith.addf %373, %375 : vector<16x8xf32>
    %cst_125 = arith.constant dense<0.000000e+00> : vector<16x16xf32>
    %377 = tpu.matmul %376, %164, %cst_125 {dimension_numbers = #tpu.dot_dimension_numbers<[1], [1], [0], [0], [0, 0, 1, 0], [], []>} : vector<16x8xf32>, vector<16x8xf32>, vector<16x16xf32> -> vector<16x16xf32>
    %cst_126 = arith.constant 0.353553385 : f32
    %378 = vector.broadcast %cst_126 : f32 to vector<16x16xf32>
    %379 = arith.mulf %377, %378 : vector<16x16xf32>
    %c0_127 = arith.constant 0 : index
    %c0_128 = arith.constant 0 : index
    %380 = vector.load %arg11[%c0_127, %c0_128] : memref<16x16xf32, #tpu.memory_space<vmem>>, vector<16x16xf32>
    %381 = arith.addf %379, %380 : vector<16x16xf32>
    %cst_129 = arith.constant dense<0xFF800000> : vector<16xf32>
    %382 = vector.multi_reduction <maximumf>, %381, %cst_129 [1] : vector<16x16xf32> to vector<16xf32>
    %383 = vector.shape_cast %382 : vector<16xf32> to vector<16x1xf32>
    %384 = vector.broadcast %383 : vector<16x1xf32> to vector<16x16xf32>
    %385 = arith.subf %381, %384 : vector<16x16xf32>
    %386 = math.exp %385 : vector<16x16xf32>
    %cst_130 = arith.constant dense<0.000000e+00> : vector<16xf32>
    %387 = vector.multi_reduction <add>, %386, %cst_130 [1] : vector<16x16xf32> to vector<16xf32>
    %388 = vector.shape_cast %387 : vector<16xf32> to vector<16x1xf32>
    %389 = vector.broadcast %388 : vector<16x1xf32> to vector<16x16xf32>
    %390 = arith.divf %386, %389 : vector<16x16xf32>
    %cst_131 = arith.constant dense<0.000000e+00> : vector<16x16xf32>
    %391 = tpu.matmul %390, %165, %cst_131 {dimension_numbers = #tpu.dot_dimension_numbers<[1], [0], [0], [1], [0, 0, 1, 1], [], []>} : vector<16x16xf32>, vector<16x16xf32>, vector<16x16xf32> -> vector<16x16xf32>
    %392 = tpu.concatenate %155, %391 in 1 : vector<16x16xf32>, vector<16x16xf32> -> vector<16x32xf32>
    %cst_132 = arith.constant 0.000000e+00 : f32
    %393 = vector.broadcast %cst_132 : f32 to vector<16x32xf32>
    %394 = arith.maximumf %392, %393 : vector<16x32xf32>
    %c0_133 = arith.constant 0 : index
    %c0_134 = arith.constant 0 : index
    %395 = vector.load %arg12[%c0_133, %c0_134] : memref<32x32xf32, #tpu.memory_space<vmem>>, vector<32x32xf32>
    %cst_135 = arith.constant dense<0.000000e+00> : vector<16x32xf32>
    %396 = tpu.matmul %394, %395, %cst_135 {dimension_numbers = #tpu.dot_dimension_numbers<[1], [0], [0], [1], [0, 0, 1, 1], [], []>} : vector<16x32xf32>, vector<32x32xf32>, vector<16x32xf32> -> vector<16x32xf32>
    %c0_136 = arith.constant 0 : index
    %c0_137 = arith.constant 0 : index
    %397 = vector.load %arg13[%c0_136, %c0_137] : memref<1x32xf32, #tpu.memory_space<vmem>>, vector<1x32xf32>
    %398 = vector.broadcast %397 : vector<1x32xf32> to vector<16x32xf32>
    %399 = arith.addf %396, %398 : vector<16x32xf32>
    %c0_138 = arith.constant 0 : index
    %c0_139 = arith.constant 0 : index
    %c0_140 = arith.constant 0 : index
    %400 = vector.load %arg14[%c0_138, %c0_139, %c0_140] : memref<1x16x32xf32, #tpu.memory_space<vmem>>, vector<1x16x32xf32>
    %401 = vector.shape_cast %400 : vector<1x16x32xf32> to vector<16x32xf32>
    %402 = vector.shape_cast %399 : vector<16x32xf32> to vector<1x16x32xf32>
    tpu.vector_store %arg14[%c0_138, %c0_139, %c0_140], %402 {strides = array<i32>} : memref<1x16x32xf32, #tpu.memory_space<vmem>>, vector<1x16x32xf32>,
    return
  }
  func.func @transform_0(%arg0: i32) -> (i32, i32, i32) {
    %c0_i32 = arith.constant 0 : i32
    %c0_i32_0 = arith.constant 0 : i32
    %c0_i32_1 = arith.constant 0 : i32
    return %arg0, %c0_i32, %c0_i32_0 : i32, i32, i32
  }
  func.func @transform_1(%arg0: i32) -> (i32, i32) {
    %c0_i32 = arith.constant 0 : i32
    %c0_i32_0 = arith.constant 0 : i32
    %c0_i32_1 = arith.constant 0 : i32
    return %c0_i32, %c0_i32_0 : i32, i32
  }
  func.func @transform_2(%arg0: i32) -> (i32, i32) {
    %c0_i32 = arith.constant 0 : i32
    %c0_i32_0 = arith.constant 0 : i32
    %c0_i32_1 = arith.constant 0 : i32
    return %c0_i32, %c0_i32_0 : i32, i32
  }
  func.func @transform_3(%arg0: i32) -> (i32, i32) {
    %c0_i32 = arith.constant 0 : i32
    %c0_i32_0 = arith.constant 0 : i32
    %c0_i32_1 = arith.constant 0 : i32
    return %c0_i32, %c0_i32_0 : i32, i32
  }
  func.func @transform_4(%arg0: i32) -> (i32, i32) {
    %c0_i32 = arith.constant 0 : i32
    %c0_i32_0 = arith.constant 0 : i32
    %c0_i32_1 = arith.constant 0 : i32
    return %c0_i32, %c0_i32_0 : i32, i32
  }
  func.func @transform_5(%arg0: i32) -> (i32, i32) {
    %c0_i32 = arith.constant 0 : i32
    %c0_i32_0 = arith.constant 0 : i32
    %c0_i32_1 = arith.constant 0 : i32
    return %c0_i32, %c0_i32_0 : i32, i32
  }
  func.func @transform_6(%arg0: i32) -> (i32, i32) {
    %c0_i32 = arith.constant 0 : i32
    %c0_i32_0 = arith.constant 0 : i32
    %c0_i32_1 = arith.constant 0 : i32
    return %c0_i32, %c0_i32_0 : i32, i32
  }
  func.func @transform_7(%arg0: i32) -> (i32, i32) {
    %c0_i32 = arith.constant 0 : i32
    %c0_i32_0 = arith.constant 0 : i32
    %c0_i32_1 = arith.constant 0 : i32
    return %c0_i32, %c0_i32_0 : i32, i32
  }
  func.func @transform_8(%arg0: i32) -> (i32, i32) {
    %c0_i32 = arith.constant 0 : i32
    %c0_i32_0 = arith.constant 0 : i32
    %c0_i32_1 = arith.constant 0 : i32
    return %c0_i32, %c0_i32_0 : i32, i32
  }
  func.func @transform_9(%arg0: i32) -> (i32, i32) {
    %c0_i32 = arith.constant 0 : i32
    %c0_i32_0 = arith.constant 0 : i32
    %c0_i32_1 = arith.constant 0 : i32
    return %c0_i32, %c0_i32_0 : i32, i32
  }
  func.func @transform_10(%arg0: i32) -> (i32, i32) {
    %c0_i32 = arith.constant 0 : i32
    %c0_i32_0 = arith.constant 0 : i32
    %c0_i32_1 = arith.constant 0 : i32
    return %c0_i32, %c0_i32_0 : i32, i32
  }
  func.func @transform_11(%arg0: i32) -> (i32, i32) {
    %c0_i32 = arith.constant 0 : i32
    %c0_i32_0 = arith.constant 0 : i32
    %c0_i32_1 = arith.constant 0 : i32
    return %c0_i32, %c0_i32_0 : i32, i32
  }
  func.func @transform_12(%arg0: i32) -> (i32, i32) {
    %c0_i32 = arith.constant 0 : i32
    %c0_i32_0 = arith.constant 0 : i32
    %c0_i32_1 = arith.constant 0 : i32
    return %c0_i32, %c0_i32_0 : i32, i32
  }
  func.func @transform_13(%arg0: i32) -> (i32, i32, i32) {
    %c0_i32 = arith.constant 0 : i32
    %c0_i32_0 = arith.constant 0 : i32
    %c0_i32_1 = arith.constant 0 : i32
    return %arg0, %c0_i32, %c0_i32_0 : i32, i32, i32
  }
}

</mosaic_0001>

<llo_original>
// kernel: tpu_custom_call.1
$region0: #{tpu_custom_call.1}
  #allocation0 [shape = 'u32[]', space=smem, size = 0x4, offset = 0x4, fixed_abs, tag = 'smem constant byte address 0x4 - core index']
  #allocation1 [shape = 'u32[72,128]{1,0:T(1,128)}', space=vmem, size = 0x9000, scoped, tag = 'internal scratch']
  #allocation2 [shape = 'f32[36,8]{1,0:T(8,128)}', space=vmem, size = 0x5000, scoped, tag = 'scratch operand']
  %s0 = inlined_call_operand.hbm [shape: f32[8,16,32], index: 0, kind: input, shape index: {}]
  %s1 = inlined_call_operand.vmem [shape: f32[16,32], index: 1, kind: input, shape index: {}]
  %s2 = inlined_call_operand.hbm [shape: f32[1,32], index: 2, kind: input, shape index: {}]
  %s3 = inlined_call_operand.vmem [shape: f32[9,8], index: 3, kind: input, shape index: {}]
  %s4 = inlined_call_operand.hbm [shape: f32[1,8], index: 4, kind: input, shape index: {}]
  %s5 = inlined_call_operand.hbm [shape: f32[16,16], index: 5, kind: input, shape index: {}]
  %s6 = inlined_call_operand.hbm [shape: f32[16,32], index: 6, kind: input, shape index: {}]
  %s7 = inlined_call_operand.hbm [shape: f32[1,32], index: 7, kind: input, shape index: {}]
  %s8 = inlined_call_operand.vmem [shape: f32[25,8], index: 8, kind: input, shape index: {}]
  %s9 = inlined_call_operand.hbm [shape: f32[1,8], index: 9, kind: input, shape index: {}]
  %s10 = inlined_call_operand.vmem [shape: f32[16,16], index: 10, kind: input, shape index: {}]
  %s11 = inlined_call_operand.vmem [shape: f32[32,32], index: 11, kind: input, shape index: {}]
  %s12 = inlined_call_operand.vmem [shape: f32[1,32], index: 12, kind: input, shape index: {}]
  %s13 = inlined_call_operand.hbm [shape: f32[8,16,32], index: 13, kind: output, shape index: {}]
  %s14 = sld [smem:[#allocation0]]
  $region113: #{tpu_custom_call.1} parent=0
    _
  %s16 = ssub.s32 1, %s14
  %s17 = scalar_select 0, %s16, %s14
  $region1: #{tpu_custom_call.1} parent=0
    #allocation3 [shape = 'u8[16384]{0}', space=vmem, size = 0x4000, scoped, tag = 'input window, operand 0']
    #allocation4 [shape = 's32[2]{0}', space=sflag, size = 0x8, scoped, tag = 'scoped memory for tpu_custom_call.1']
    #allocation5 [shape = 's32[2]{0}', space=sflag, size = 0x8, scoped, tag = 'scoped memory for tpu_custom_call.1']
    #allocation6 [shape = 'u8[512]{0}', space=vmem, size = 0x400, scoped, tag = 'input window, operand 2, single buffered']
    #allocation7 [shape = 's32[1]{0}', space=sflag, size = 0x4, scoped, tag = 'scoped memory for tpu_custom_call.1']
    #allocation8 [shape = 'u8[512]{0}', space=vmem, size = 0x400, scoped, tag = 'input window, operand 4, single buffered']
    #allocation9 [shape = 'u8[8192]{0}', space=vmem, size = 0x2000, scoped, tag = 'input window, operand 5, single buffered']
    #allocation10 [shape = 's32[1]{0}', space=sflag, size = 0x4, scoped, tag = 'scoped memory for tpu_custom_call.1']
    #allocation11 [shape = 'u8[8192]{0}', space=vmem, size = 0x2000, scoped, tag = 'input window, operand 6, single buffered']
    #allocation12 [shape = 'u8[512]{0}', space=vmem, size = 0x400, scoped, tag = 'input window, operand 7, single buffered']
    #allocation13 [shape = 's32[1]{0}', space=sflag, size = 0x4, scoped, tag = 'scoped memory for tpu_custom_call.1']
    #allocation14 [shape = 'u8[512]{0}', space=vmem, size = 0x400, scoped, tag = 'input window, operand 9, single buffered']
    #allocation15 [shape = 'u8[16384]{0}', space=vmem, size = 0x4000, scoped, tag = 'output window, operand 0']
    %18 = vsyncpa [#allocation4], 0
    %s19 = scalar_lea.sflag [#allocation4], 1
    %20 = vsyncpa %s19, 0
    %21 = vsyncpa [#allocation7], 0
    %22 = vsyncpa [#allocation10], 0
    %23 = vsyncpa [#allocation13], 0
    %24 = vsyncpa [#allocation5], 0
    %s25 = scalar_lea.sflag [#allocation5], 1
    %26 = vsyncpa %s25, 0
    loop: start=0, step=1, limit=10
    $region2: #{tpu_custom_call.1} parent=1 // loop_pre_header
      _
    $region3: #{tpu_custom_call.1} parent=1 // loop_header
      %s28 = sphi 0, %s32
      %p29 = scmp.ge.s32.totalorder %s28, 10
      %s38 = sphi 0, %s40
      %s41 = sphi 0, %s38
      %s42 = sphi 0, %s41
      %s58 = sphi 0, %s42
      %s62 = sphi 0, %s62
      %s64 = sphi 0, %s62
      %s65 = sphi 0, %s64
      %s79 = sphi 0, %s65
      %s83 = sphi 0, %s83
      %s85 = sphi 0, %s83
      %s86 = sphi 0, %s85
      %s100 = sphi 0, %s86
      %s104 = sphi 0, %s104
      %s106 = sphi 0, %s104
      %s107 = sphi 0, %s106
      %s121 = sphi 0, %s107
      %s125 = sphi 0, %s125
      %s127 = sphi 0, %s125
      %s128 = sphi 0, %s127
      %s142 = sphi 0, %s128
      %s146 = sphi 0, %s146
      %s148 = sphi 0, %s146
      %s149 = sphi 0, %s148
      %s163 = sphi 0, %s149
      %s167 = sphi 0, %s167
      %s169 = sphi 0, %s167
      %s170 = sphi 0, %s169
      %s184 = sphi 0, %s170
      %s188 = sphi 0, %s188
      %s190 = sphi 0, %s188
      %s191 = sphi 0, %s190
      %s205 = sphi 0, %s191
      %s209 = sphi 0, %s209
      %s211 = sphi 0, %s209
      %s212 = sphi 0, %s211
      %s226 = sphi 0, %s212
      %s230 = sphi 0, %s230
      %s232 = sphi 0, %s230
      %s233 = sphi 0, %s232
      %s247 = sphi 0, %s233
      %s251 = sphi 0, %s251
      %s253 = sphi 0, %s251
      %s254 = sphi 0, %s253
      %s268 = sphi 0, %s254
      %s272 = sphi 0, %s272
      %s274 = sphi 0, %s272
      %s275 = sphi 0, %s274
      %s289 = sphi 0, %s275
      %s293 = sphi 0, %s293
      %s295 = sphi 0, %s293
      %s296 = sphi 0, %s295
      %s310 = sphi 0, %s296
      %s316 = sphi 0, %s318
      %s319 = sphi 0, %s316
      %s320 = sphi 0, %s319
      %s336 = sphi 0, %s320
    $region4: #{tpu_custom_call.1} parent=1 // loop_header_branch
      %31 = sbr.rel (%p29) target = $region8
    $region5: #{tpu_custom_call.1} parent=1 // loop_body
      %s33 = ssub.s32 %s28, 1
      %s34 = ssub.s32 %s28, 2
      %s35 = sadd.s32 %s28, 1
      %s36 = ssub.s32 %s28, %s35
      %p37 = scmp.eq.s32.totalorder %s36, 0
      %s39 = sadd.s32 %s38, 1
      %s40 = scalar_select %p37, %s38, %s39
      %p43 = pneg %p37
      %p44 = scmp.eq.s32.totalorder %s28, 7
      %p45 = por %p43, %p44
      %p46 = scmp.ne.s32.totalorder %s38, %s41
      %p47 = scmp.eq.s32.totalorder %s28, 0
      %p48 = por %p46, %p47
      %p49 = scmp.ne.s32.totalorder %s38, %s41
      %p50 = scmp.eq.s32.totalorder %s33, 7
      %p51 = por %p49, %p50
      %p52 = scmp.ne.s32.totalorder %s41, %s42
      %p53 = scmp.eq.s32.totalorder %s33, 0
      %p54 = por %p52, %p53
      %p55 = scmp.ne.s32.totalorder %s41, %s42
      %p56 = scmp.eq.s32.totalorder %s34, 7
      %p57 = por %p55, %p56
      %p59 = scmp.ne.s32.totalorder %s42, %s58
      %p60 = scmp.eq.s32.totalorder %s34, 0
      %p61 = por %p59, %p60
      %s63 = sadd.s32 %s62, 1
      %p66 = scmp.eq.s32.totalorder %s28, 7
      %p67 = scmp.ne.s32.totalorder %s62, %s64
      %p68 = scmp.eq.s32.totalorder %s28, 0
      %p69 = por %p67, %p68
      %p70 = scmp.ne.s32.totalorder %s62, %s64
      %p71 = scmp.eq.s32.totalorder %s33, 7
      %p72 = por %p70, %p71
      %p73 = scmp.ne.s32.totalorder %s64, %s65
      %p74 = scmp.eq.s32.totalorder %s33, 0
      %p75 = por %p73, %p74
      %p76 = scmp.ne.s32.totalorder %s64, %s65
      %p77 = scmp.eq.s32.totalorder %s34, 7
      %p78 = por %p76, %p77
      %p80 = scmp.ne.s32.totalorder %s65, %s79
      %p81 = scmp.eq.s32.totalorder %s34, 0
      %p82 = por %p80, %p81
      %s84 = sadd.s32 %s83, 1
      %p87 = scmp.eq.s32.totalorder %s28, 7
      %p88 = scmp.ne.s32.totalorder %s83, %s85
      %p89 = scmp.eq.s32.totalorder %s28, 0
      %p90 = por %p88, %p89
      %p91 = scmp.ne.s32.totalorder %s83, %s85
      %p92 = scmp.eq.s32.totalorder %s33, 7
      %p93 = por %p91, %p92
      %p94 = scmp.ne.s32.totalorder %s85, %s86
      %p95 = scmp.eq.s32.totalorder %s33, 0
      %p96 = por %p94, %p95
      %p97 = scmp.ne.s32.totalorder %s85, %s86
      %p98 = scmp.eq.s32.totalorder %s34, 7
      %p99 = por %p97, %p98
      %p101 = scmp.ne.s32.totalorder %s86, %s100
      %p102 = scmp.eq.s32.totalorder %s34, 0
      %p103 = por %p101, %p102
      %s105 = sadd.s32 %s104, 1
      %p108 = scmp.eq.s32.totalorder %s28, 7
      %p109 = scmp.ne.s32.totalorder %s104, %s106
      %p110 = scmp.eq.s32.totalorder %s28, 0
      %p111 = por %p109, %p110
      %p112 = scmp.ne.s32.totalorder %s104, %s106
      %p113 = scmp.eq.s32.totalorder %s33, 7
      %p114 = por %p112, %p113
      %p115 = scmp.ne.s32.totalorder %s106, %s107
      %p116 = scmp.eq.s32.totalorder %s33, 0
      %p117 = por %p115, %p116
      %p118 = scmp.ne.s32.totalorder %s106, %s107
      %p119 = scmp.eq.s32.totalorder %s34, 7
      %p120 = por %p118, %p119
      %p122 = scmp.ne.s32.totalorder %s107, %s121
      %p123 = scmp.eq.s32.totalorder %s34, 0
      %p124 = por %p122, %p123
      %s126 = sadd.s32 %s125, 1
      %p129 = scmp.eq.s32.totalorder %s28, 7
      %p130 = scmp.ne.s32.totalorder %s125, %s127
      %p131 = scmp.eq.s32.totalorder %s28, 0
      %p132 = por %p130, %p131
      %p133 = scmp.ne.s32.totalorder %s125, %s127
      %p134 = scmp.eq.s32.totalorder %s33, 7
      %p135 = por %p133, %p134
      %p136 = scmp.ne.s32.totalorder %s127, %s128
      %p137 = scmp.eq.s32.totalorder %s33, 0
      %p138 = por %p136, %p137
      %p139 = scmp.ne.s32.totalorder %s127, %s128
      %p140 = scmp.eq.s32.totalorder %s34, 7
      %p141 = por %p139, %p140
      %p143 = scmp.ne.s32.totalorder %s128, %s142
      %p144 = scmp.eq.s32.totalorder %s34, 0
      %p145 = por %p143, %p144
      %s147 = sadd.s32 %s146, 1
      %p150 = scmp.eq.s32.totalorder %s28, 7
      %p151 = scmp.ne.s32.totalorder %s146, %s148
      %p152 = scmp.eq.s32.totalorder %s28, 0
      %p153 = por %p151, %p152
      %p154 = scmp.ne.s32.totalorder %s146, %s148
      %p155 = scmp.eq.s32.totalorder %s33, 7
      %p156 = por %p154, %p155
      %p157 = scmp.ne.s32.totalorder %s148, %s149
      %p158 = scmp.eq.s32.totalorder %s33, 0
      %p159 = por %p157, %p158
      %p160 = scmp.ne.s32.totalorder %s148, %s149
      %p161 = scmp.eq.s32.totalorder %s34, 7
      %p162 = por %p160, %p161
      %p164 = scmp.ne.s32.totalorder %s149, %s163
      %p165 = scmp.eq.s32.totalorder %s34, 0
      %p166 = por %p164, %p165
      %s168 = sadd.s32 %s167, 1
      %p171 = scmp.eq.s32.totalorder %s28, 7
      %p172 = scmp.ne.s32.totalorder %s167, %s169
      %p173 = scmp.eq.s32.totalorder %s28, 0
      %p174 = por %p172, %p173
      %p175 = scmp.ne.s32.totalorder %s167, %s169
      %p176 = scmp.eq.s32.totalorder %s33, 7
      %p177 = por %p175, %p176
      %p178 = scmp.ne.s32.totalorder %s169, %s170
      %p179 = scmp.eq.s32.totalorder %s33, 0
      %p180 = por %p178, %p179
      %p181 = scmp.ne.s32.totalorder %s169, %s170
      %p182 = scmp.eq.s32.totalorder %s34, 7
      %p183 = por %p181, %p182
      %p185 = scmp.ne.s32.totalorder %s170, %s184
      %p186 = scmp.eq.s32.totalorder %s34, 0
      %p187 = por %p185, %p186
      %s189 = sadd.s32 %s188, 1
      %p192 = scmp.eq.s32.totalorder %s28, 7
      %p193 = scmp.ne.s32.totalorder %s188, %s190
      %p194 = scmp.eq.s32.totalorder %s28, 0
      %p195 = por %p193, %p194
      %p196 = scmp.ne.s32.totalorder %s188, %s190
      %p197 = scmp.eq.s32.totalorder %s33, 7
      %p198 = por %p196, %p197
      %p199 = scmp.ne.s32.totalorder %s190, %s191
      %p200 = scmp.eq.s32.totalorder %s33, 0
      %p201 = por %p199, %p200
      %p202 = scmp.ne.s32.totalorder %s190, %s191
      %p203 = scmp.eq.s32.totalorder %s34, 7
      %p204 = por %p202, %p203
      %p206 = scmp.ne.s32.totalorder %s191, %s205
      %p207 = scmp.eq.s32.totalorder %s34, 0
      %p208 = por %p206, %p207
      %s210 = sadd.s32 %s209, 1
      %p213 = scmp.eq.s32.totalorder %s28, 7
      %p214 = scmp.ne.s32.totalorder %s209, %s211
      %p215 = scmp.eq.s32.totalorder %s28, 0
      %p216 = por %p214, %p215
      %p217 = scmp.ne.s32.totalorder %s209, %s211
      %p218 = scmp.eq.s32.totalorder %s33, 7
      %p219 = por %p217, %p218
      %p220 = scmp.ne.s32.totalorder %s211, %s212
      %p221 = scmp.eq.s32.totalorder %s33, 0
      %p222 = por %p220, %p221
      %p223 = scmp.ne.s32.totalorder %s211, %s212
      %p224 = scmp.eq.s32.totalorder %s34, 7
      %p225 = por %p223, %p224
      %p227 = scmp.ne.s32.totalorder %s212, %s226
      %p228 = scmp.eq.s32.totalorder %s34, 0
      %p229 = por %p227, %p228
      %s231 = sadd.s32 %s230, 1
      %p234 = scmp.eq.s32.totalorder %s28, 7
      %p235 = scmp.ne.s32.totalorder %s230, %s232
      %p236 = scmp.eq.s32.totalorder %s28, 0
      %p237 = por %p235, %p236
      %p238 = scmp.ne.s32.totalorder %s230, %s232
      %p239 = scmp.eq.s32.totalorder %s33, 7
      %p240 = por %p238, %p239
      %p241 = scmp.ne.s32.totalorder %s232, %s233
      %p242 = scmp.eq.s32.totalorder %s33, 0
      %p243 = por %p241, %p242
      %p244 = scmp.ne.s32.totalorder %s232, %s233
      %p245 = scmp.eq.s32.totalorder %s34, 7
      %p246 = por %p244, %p245
      %p248 = scmp.ne.s32.totalorder %s233, %s247
      %p249 = scmp.eq.s32.totalorder %s34, 0
      %p250 = por %p248, %p249
      %s252 = sadd.s32 %s251, 1
      %p255 = scmp.eq.s32.totalorder %s28, 7
      %p256 = scmp.ne.s32.totalorder %s251, %s253
      %p257 = scmp.eq.s32.totalorder %s28, 0
      %p258 = por %p256, %p257
      %p259 = scmp.ne.s32.totalorder %s251, %s253
      %p260 = scmp.eq.s32.totalorder %s33, 7
      %p261 = por %p259, %p260
      %p262 = scmp.ne.s32.totalorder %s253, %s254
      %p263 = scmp.eq.s32.totalorder %s33, 0
      %p264 = por %p262, %p263
      %p265 = scmp.ne.s32.totalorder %s253, %s254
      %p266 = scmp.eq.s32.totalorder %s34, 7
      %p267 = por %p265, %p266
      %p269 = scmp.ne.s32.totalorder %s254, %s268
      %p270 = scmp.eq.s32.totalorder %s34, 0
      %p271 = por %p269, %p270
      %s273 = sadd.s32 %s272, 1
      %p276 = scmp.eq.s32.totalorder %s28, 7
      %p277 = scmp.ne.s32.totalorder %s272, %s274
      %p278 = scmp.eq.s32.totalorder %s28, 0
      %p279 = por %p277, %p278
      %p280 = scmp.ne.s32.totalorder %s272, %s274
      %p281 = scmp.eq.s32.totalorder %s33, 7
      %p282 = por %p280, %p281
      %p283 = scmp.ne.s32.totalorder %s274, %s275
      %p284 = scmp.eq.s32.totalorder %s33, 0
      %p285 = por %p283, %p284
      %p286 = scmp.ne.s32.totalorder %s274, %s275
      %p287 = scmp.eq.s32.totalorder %s34, 7
      %p288 = por %p286, %p287
      %p290 = scmp.ne.s32.totalorder %s275, %s289
      %p291 = scmp.eq.s32.totalorder %s34, 0
      %p292 = por %p290, %p291
      %s294 = sadd.s32 %s293, 1
      %p297 = scmp.eq.s32.totalorder %s28, 7
      %p298 = scmp.ne.s32.totalorder %s293, %s295
      %p299 = scmp.eq.s32.totalorder %s28, 0
      %p300 = por %p298, %p299
      %p301 = scmp.ne.s32.totalorder %s293, %s295
      %p302 = scmp.eq.s32.totalorder %s33, 7
      %p303 = por %p301, %p302
      %p304 = scmp.ne.s32.totalorder %s295, %s296
      %p305 = scmp.eq.s32.totalorder %s33, 0
      %p306 = por %p304, %p305
      %p307 = scmp.ne.s32.totalorder %s295, %s296
      %p308 = scmp.eq.s32.totalorder %s34, 7
      %p309 = por %p307, %p308
      %p311 = scmp.ne.s32.totalorder %s296, %s310
      %p312 = scmp.eq.s32.totalorder %s34, 0
      %p313 = por %p311, %p312
      %s314 = ssub.s32 %s28, %s35
      %p315 = scmp.eq.s32.totalorder %s314, 0
      %s317 = sadd.s32 %s316, 1
      %s318 = scalar_select %p315, %s316, %s317
      %p321 = pneg %p315
      %p322 = scmp.eq.s32.totalorder %s28, 7
      %p323 = por %p321, %p322
      %p324 = scmp.ne.s32.totalorder %s316, %s319
      %p325 = scmp.eq.s32.totalorder %s28, 0
      %p326 = por %p324, %p325
      %p327 = scmp.ne.s32.totalorder %s316, %s319
      %p328 = scmp.eq.s32.totalorder %s33, 7
      %p329 = por %p327, %p328
      %p330 = scmp.ne.s32.totalorder %s319, %s320
      %p331 = scmp.eq.s32.totalorder %s33, 0
      %p332 = por %p330, %p331
      %p333 = scmp.ne.s32.totalorder %s319, %s320
      %p334 = scmp.eq.s32.totalorder %s34, 7
      %p335 = por %p333, %p334
      %p337 = scmp.ne.s32.totalorder %s320, %s336
      %p338 = scmp.eq.s32.totalorder %s34, 0
      %p339 = por %p337, %p338
      %p340 = scmp.le.s32.totalorder 1, %s28
      %p341 = scmp.lt.s32.totalorder %s28, 9
      %p342 = pnand %p340, %p341
      %p343 = pneg %p342
      // Predicated region
      $region9: #{tpu_custom_call.1} parent=5 // pred_check
        _
      $region10: #{tpu_custom_call.1} parent=5 // pred_check_branch
        %345 = sbr.rel (%p342) target = $region12
      $region11: #{tpu_custom_call.1} parent=5 // pred_region
        %s346 = ssub.s32 %s28, 1
        // Predicated region
        $region13: #{tpu_custom_call.1} parent=11 // pred_check
          %p347 = pneg %p75
        $region14: #{tpu_custom_call.1} parent=11 // pred_check_branch
          %349 = sbr.rel (%p347) target = $region16
        $region15: #{tpu_custom_call.1} parent=11 // pred_region
          _
        $region16: #{tpu_custom_call.1} parent=11 // pred_fallthru
          _
        // Predicated region
        $region17: #{tpu_custom_call.1} parent=11 // pred_check
          %p350 = pneg %p96
        $region18: #{tpu_custom_call.1} parent=11 // pred_check_branch
          %352 = sbr.rel (%p350) target = $region20
        $region19: #{tpu_custom_call.1} parent=11 // pred_region
          %354 = vsyncadd [#allocation7], 0
          %s356 = sshll.u32 %s2, 4
          %s357 = int_to_ptr.hbm [resolvable:$true] %s356
          %s358 = sshll.u32 [#allocation6], 4
          %s359 = int_to_ptr.vmem [resolvable:$true] %s358
          %361 = dma.hbm_to_vmem [thread:$0]  %s357, 16, %s359, [#allocation7]
        $region20: #{tpu_custom_call.1} parent=11 // pred_fallthru
          _
        // Predicated region
        $region21: #{tpu_custom_call.1} parent=11 // pred_check
          %p362 = pneg %p117
        $region22: #{tpu_custom_call.1} parent=11 // pred_check_branch
          %364 = sbr.rel (%p362) target = $region24
        $region23: #{tpu_custom_call.1} parent=11 // pred_region
          _
        $region24: #{tpu_custom_call.1} parent=11 // pred_fallthru
          _
        // Predicated region
        $region25: #{tpu_custom_call.1} parent=11 // pred_check
          %p365 = pneg %p138
        $region26: #{tpu_custom_call.1} parent=11 // pred_check_branch
          %367 = sbr.rel (%p365) target = $region28
        $region27: #{tpu_custom_call.1} parent=11 // pred_region
          %369 = vsyncadd [#allocation7], 0
          %s371 = sshll.u32 %s4, 4
          %s372 = int_to_ptr.hbm [resolvable:$true] %s371
          %s373 = sshll.u32 [#allocation8], 4
          %s374 = int_to_ptr.vmem [resolvable:$true] %s373
          %376 = dma.hbm_to_vmem [thread:$0]  %s372, 16, %s374, [#allocation7]
        $region28: #{tpu_custom_call.1} parent=11 // pred_fallthru
          _
        // Predicated region
        $region29: #{tpu_custom_call.1} parent=11 // pred_check
          %p377 = pneg %p159
        $region30: #{tpu_custom_call.1} parent=11 // pred_check_branch
          %379 = sbr.rel (%p377) target = $region32
        $region31: #{tpu_custom_call.1} parent=11 // pred_region
          %381 = vsyncadd [#allocation10], 0
          %s382 = sshll.u32 %s5, 4
          %s383 = int_to_ptr.hbm [resolvable:$true] %s382
          %s384 = sshll.u32 [#allocation9], 4
          %s385 = int_to_ptr.vmem [resolvable:$true] %s384
          %390 = dma.hbm_to_vmem [thread:$0]  %s383, 256, %s385, [#allocation10], 128, 128, 8
        $region32: #{tpu_custom_call.1} parent=11 // pred_fallthru
          _
        // Predicated region
        $region33: #{tpu_custom_call.1} parent=11 // pred_check
          %p391 = pneg %p180
        $region34: #{tpu_custom_call.1} parent=11 // pred_check_branch
          %393 = sbr.rel (%p391) target = $region36
        $region35: #{tpu_custom_call.1} parent=11 // pred_region
          %395 = vsyncadd [#allocation10], 0
          %s396 = sshll.u32 %s6, 4
          %s397 = int_to_ptr.hbm [resolvable:$true] %s396
          %s398 = sshll.u32 [#allocation11], 4
          %s399 = int_to_ptr.vmem [resolvable:$true] %s398
          %404 = dma.hbm_to_vmem [thread:$0]  %s397, 256, %s399, [#allocation10], 128, 128, 8
        $region36: #{tpu_custom_call.1} parent=11 // pred_fallthru
          _
        // Predicated region
        $region37: #{tpu_custom_call.1} parent=11 // pred_check
          %p405 = pneg %p201
        $region38: #{tpu_custom_call.1} parent=11 // pred_check_branch
          %407 = sbr.rel (%p405) target = $region40
        $region39: #{tpu_custom_call.1} parent=11 // pred_region
          %409 = vsyncadd [#allocation13], 0
          %s411 = sshll.u32 %s7, 4
          %s412 = int_to_ptr.hbm [resolvable:$true] %s411
          %s413 = sshll.u32 [#allocation12], 4
          %s414 = int_to_ptr.vmem [resolvable:$true] %s413
          %416 = dma.hbm_to_vmem [thread:$0]  %s412, 16, %s414, [#allocation13]
        $region40: #{tpu_custom_call.1} parent=11 // pred_fallthru
          _
        // Predicated region
        $region41: #{tpu_custom_call.1} parent=11 // pred_check
          %p417 = pneg %p222
        $region42: #{tpu_custom_call.1} parent=11 // pred_check_branch
          %419 = sbr.rel (%p417) target = $region44
        $region43: #{tpu_custom_call.1} parent=11 // pred_region
          _
        $region44: #{tpu_custom_call.1} parent=11 // pred_fallthru
          _
        // Predicated region
        $region45: #{tpu_custom_call.1} parent=11 // pred_check
          %p420 = pneg %p243
        $region46: #{tpu_custom_call.1} parent=11 // pred_check_branch
          %422 = sbr.rel (%p420) target = $region48
        $region47: #{tpu_custom_call.1} parent=11 // pred_region
          %424 = vsyncadd [#allocation13], 0
          %s426 = sshll.u32 %s9, 4
          %s427 = int_to_ptr.hbm [resolvable:$true] %s426
          %s428 = sshll.u32 [#allocation14], 4
          %s429 = int_to_ptr.vmem [resolvable:$true] %s428
          %431 = dma.hbm_to_vmem [thread:$0]  %s427, 16, %s429, [#allocation13]
        $region48: #{tpu_custom_call.1} parent=11 // pred_fallthru
          _
        // Predicated region
        $region49: #{tpu_custom_call.1} parent=11 // pred_check
          %p432 = pneg %p264
        $region50: #{tpu_custom_call.1} parent=11 // pred_check_branch
          %434 = sbr.rel (%p432) target = $region52
        $region51: #{tpu_custom_call.1} parent=11 // pred_region
          _
        $region52: #{tpu_custom_call.1} parent=11 // pred_fallthru
          _
        // Predicated region
        $region53: #{tpu_custom_call.1} parent=11 // pred_check
          %p435 = pneg %p285
        $region54: #{tpu_custom_call.1} parent=11 // pred_check_branch
          %437 = sbr.rel (%p435) target = $region56
        $region55: #{tpu_custom_call.1} parent=11 // pred_region
          _
        $region56: #{tpu_custom_call.1} parent=11 // pred_fallthru
          _
        // Predicated region
        $region57: #{tpu_custom_call.1} parent=11 // pred_check
          %p438 = pneg %p306
        $region58: #{tpu_custom_call.1} parent=11 // pred_check_branch
          %440 = sbr.rel (%p438) target = $region60
        $region59: #{tpu_custom_call.1} parent=11 // pred_region
          _
        $region60: #{tpu_custom_call.1} parent=11 // pred_fallthru
          _
      $region12: #{tpu_custom_call.1} parent=5 // pred_fallthru
        _
      %p441 = scmp.lt.s32.totalorder %s28, 8
      // Predicated region
      $region61: #{tpu_custom_call.1} parent=5 // pred_check
        %p442 = pneg %p441
      $region62: #{tpu_custom_call.1} parent=5 // pred_check_branch
        %444 = sbr.rel (%p442) target = $region64
      $region63: #{tpu_custom_call.1} parent=5 // pred_region
        // Predicated region
        $region65: #{tpu_custom_call.1} parent=63 // pred_check
          %p445 = pneg %p48
        $region66: #{tpu_custom_call.1} parent=63 // pred_check_branch
          %447 = sbr.rel (%p445) target = $region68
        $region67: #{tpu_custom_call.1} parent=63 // pred_region
          %s448 = sand.u32 %s38, 1
          %s449 = scalar_lea.sflag [#allocation4], %s448
          %s450 = sand.u32 %s38, 1
          %s451 = smul.addr %s450, 16
          %s452 = scalar_lea.vmem [#allocation3], %s451
          %454 = vsyncadd %s449, 0
          %s455 = smul.addr %s28, 2
          %s456 = smul.addr %s455, 8
          %s457 = scalar_lea.hbm %s0, %s456
          %s458 = sshll.u32 %s457, 4
          %s459 = int_to_ptr.hbm [resolvable:$true] %s458
          %s460 = sshll.u32 %s452, 4
          %s461 = int_to_ptr.vmem [resolvable:$true] %s460
          %466 = dma.hbm_to_vmem [thread:$0]  %s459, 256, %s461, %s449, 128, 128, 8
        $region68: #{tpu_custom_call.1} parent=63 // pred_fallthru
          _
      $region64: #{tpu_custom_call.1} parent=5 // pred_fallthru
        _
      %p467 = scmp.le.s32.totalorder 1, %s28
      %p468 = scmp.lt.s32.totalorder %s28, 9
      %p469 = pnand %p467, %p468
      %p470 = pneg %p469
      // Predicated region
      $region69: #{tpu_custom_call.1} parent=5 // pred_check
        _
      $region70: #{tpu_custom_call.1} parent=5 // pred_check_branch
        %472 = sbr.rel (%p469) target = $region72
      $region71: #{tpu_custom_call.1} parent=5 // pred_region
        %s473 = ssub.s32 %s28, 1
        %s474 = sand.u32 %s41, 1
        %s475 = scalar_lea.sflag [#allocation4], %s474
        %s476 = sand.u32 %s41, 1
        %s477 = smul.addr %s476, 16
        %s478 = scalar_lea.vmem [#allocation3], %s477
        // Predicated region
        $region73: #{tpu_custom_call.1} parent=71 // pred_check
          %p479 = pneg %p54
        $region74: #{tpu_custom_call.1} parent=71 // pred_check_branch
          %481 = sbr.rel (%p479) target = $region76
        $region75: #{tpu_custom_call.1} parent=71 // pred_region
          %483 = dma.done %s475, 256
        $region76: #{tpu_custom_call.1} parent=71 // pred_fallthru
          _
        // Predicated region
        $region77: #{tpu_custom_call.1} parent=71 // pred_check
          %p484 = pneg %p96
        $region78: #{tpu_custom_call.1} parent=71 // pred_check_branch
          %486 = sbr.rel (%p484) target = $region80
        $region79: #{tpu_custom_call.1} parent=71 // pred_region
          %488 = dma.done [#allocation7], 16
        $region80: #{tpu_custom_call.1} parent=71 // pred_fallthru
          _
        // Predicated region
        $region81: #{tpu_custom_call.1} parent=71 // pred_check
          %p489 = pneg %p138
        $region82: #{tpu_custom_call.1} parent=71 // pred_check_branch
          %491 = sbr.rel (%p489) target = $region84
        $region83: #{tpu_custom_call.1} parent=71 // pred_region
          %493 = dma.done [#allocation7], 16
        $region84: #{tpu_custom_call.1} parent=71 // pred_fallthru
          _
        // Predicated region
        $region85: #{tpu_custom_call.1} parent=71 // pred_check
          %p494 = pneg %p159
        $region86: #{tpu_custom_call.1} parent=71 // pred_check_branch
          %496 = sbr.rel (%p494) target = $region88
        $region87: #{tpu_custom_call.1} parent=71 // pred_region
          %498 = dma.done [#allocation10], 256
        $region88: #{tpu_custom_call.1} parent=71 // pred_fallthru
          _
        // Predicated region
        $region89: #{tpu_custom_call.1} parent=71 // pred_check
          %p499 = pneg %p180
        $region90: #{tpu_custom_call.1} parent=71 // pred_check_branch
          %501 = sbr.rel (%p499) target = $region92
        $region91: #{tpu_custom_call.1} parent=71 // pred_region
          %503 = dma.done [#allocation10], 256
        $region92: #{tpu_custom_call.1} parent=71 // pred_fallthru
          _
        // Predicated region
        $region93: #{tpu_custom_call.1} parent=71 // pred_check
          %p504 = pneg %p201
        $region94: #{tpu_custom_call.1} parent=71 // pred_check_branch
          %506 = sbr.rel (%p504) target = $region96
        $region95: #{tpu_custom_call.1} parent=71 // pred_region
          %508 = dma.done [#allocation13], 16
        $region96: #{tpu_custom_call.1} parent=71 // pred_fallthru
          _
        // Predicated region
        $region97: #{tpu_custom_call.1} parent=71 // pred_check
          %p509 = pneg %p243
        $region98: #{tpu_custom_call.1} parent=71 // pred_check_branch
          %511 = sbr.rel (%p509) target = $region100
        $region99: #{tpu_custom_call.1} parent=71 // pred_region
          %513 = dma.done [#allocation13], 16
        $region100: #{tpu_custom_call.1} parent=71 // pred_fallthru
          _
        %s514 = sand.u32 %s41, 1
        %s515 = scalar_lea.sflag [#allocation4], %s514
        %s516 = sand.u32 %s41, 1
        %s517 = smul.addr %s516, 16
        %s518 = scalar_lea.vmem [#allocation3], %s517
        %p519 = pneg %p54
        %p520 = pneg %p51
        %p521 = pneg %p75
        %p522 = pneg %p72
        %p523 = pneg %p96
        %p524 = pneg %p93
        %p525 = pneg %p117
        %p526 = pneg %p114
        %p527 = pneg %p138
        %p528 = pneg %p135
        %p529 = pneg %p159
        %p530 = pneg %p156
        %p531 = pneg %p180
        %p532 = pneg %p177
        %p533 = pneg %p201
        %p534 = pneg %p198
        %p535 = pneg %p222
        %p536 = pneg %p219
        %p537 = pneg %p243
        %p538 = pneg %p240
        %p539 = pneg %p264
        %p540 = pneg %p261
        %p541 = pneg %p285
        %p542 = pneg %p282
        %p543 = pneg %p306
        %p544 = pneg %p303
        %p545 = pneg %p332
        %p546 = pneg %p329
        %s547 = sand.u32 %s319, 1
        %s548 = scalar_lea.sflag [#allocation5], %s547
        %s549 = sand.u32 %s319, 1
        %s550 = smul.addr %s549, 16
        %s551 = scalar_lea.vmem [#allocation15], %s550
        %v552 = vld [vmem:[%s478] sm:$0xff]
        %v553 = vld [vmem:[%s478 + $0x8] sm:$0xff]
        %vm554 = vcmask 64512
        %555 = vst.msk [vmem:[#allocation2] sm:$0xff] %vm554, 0.0
        %556 = vst.msk [vmem:[#allocation2 + $0x8] sm:$0xff] %vm554, 0.0
        %557 = vst.msk [vmem:[#allocation2 + $0x10] sm:$0xff] %vm554, 0.0
        %558 = vst.msk [vmem:[#allocation2 + $0x18] sm:$0xff] %vm554, 0.0
        %vm559 = vcmask 60416
        %560 = vst.msk [vmem:[#allocation2 + $0x20] sm:$0xf] %vm559, 0.0
        %v561 = vlaneseq
        %v562 = vshrl.u32 %v561, 7
        %v563 = vadd.s32 %v562, 8
        %vm564 = vcmp.lt.s32.totalorder %v562, 0
        %v565 = vsub.s32 0, %v562
        %v566 = vsel %vm564, %v565, %v562
        %v567 = vshrl.u32 %v566, 2
        %v568 = vand.u32 %v566, 3
        %v569 = vsub.s32 0, %v568
        %v570 = vsel %vm564, %v569, %v568
        %vm571 = vcmp.lt.s32.totalorder %v563, 0
        %v572 = vsub.s32 0, %v563
        %v573 = vsel %vm571, %v572, %v563
        %v574 = vshrl.u32 %v573, 2
        %v575 = vand.u32 %v573, 3
        %v576 = vsub.s32 0, %v575
        %v577 = vsel %vm571, %v576, %v575
        %vm578 = vcmp.ne.s32.totalorder %v570, 0
        %vm579 = vcmp.ne.s32.totalorder %v577, 0
        %vm580 = vcmp.lt.s32.totalorder %v570, 0
        %vm581 = vcmp.lt.s32.totalorder %v577, 0
        %vm582 = vmand %vm580, %vm578
        %vm583 = vmand %vm581, %vm579
        %v584 = vadd.s32 %v570, 4
        %v585 = vadd.s32 %v577, 4
        %v586 = vsel %vm582, %v584, %v570
        %v587 = vsel %vm583, %v585, %v577
        %v588 = vadd.s32 %v586, 4294967294
        %v589 = vadd.s32 %v587, 4294967294
        %vm590 = vcmp.ge.s32.totalorder %v588, 0
        %vm591 = vcmp.ge.s32.totalorder %v589, 0
        %vm592 = vcmp.lt.s32.totalorder %v588, 4
        %vm593 = vcmp.lt.s32.totalorder %v589, 4
        %vm594 = vmand %vm590, %vm592
        %vm595 = vmand %vm591, %vm593
        %v596 = vadd.s32 %v586, 4294967295
        %v597 = vadd.s32 %v587, 4294967295
        %vm598 = vcmp.ge.s32.totalorder %v596, 0
        %vm599 = vcmp.ge.s32.totalorder %v597, 0
        %vm600 = vcmp.lt.s32.totalorder %v596, 4
        %vm601 = vcmp.lt.s32.totalorder %v597, 4
        %vm602 = vmand %vm598, %vm600
        %vm603 = vmand %vm599, %vm601
        %v604 = vadd.s32 %v586, 1
        %v605 = vadd.s32 %v587, 1
        %vm606 = vcmp.ge.s32.totalorder %v604, 0
        %vm607 = vcmp.ge.s32.totalorder %v605, 0
        %vm608 = vcmp.lt.s32.totalorder %v604, 4
        %vm609 = vcmp.lt.s32.totalorder %v605, 4
        %vm610 = vmand %vm606, %vm608
        %vm611 = vmand %vm607, %vm609
        %v612 = vadd.s32 %v586, 2
        %v613 = vadd.s32 %v587, 2
        %vm614 = vcmp.ge.s32.totalorder %v612, 0
        %vm615 = vcmp.ge.s32.totalorder %v613, 0
        %vm616 = vcmp.lt.s32.totalorder %v612, 4
        %vm617 = vcmp.lt.s32.totalorder %v613, 4
        %vm618 = vmand %vm614, %vm616
        %vm619 = vmand %vm615, %vm617
        %v620 = vld [vmem:[%s1] sm:$0xff]
        %v621 = vld [vmem:[%s1 + $0x8] sm:$0xff]
        %v622 = vld [vmem:[#allocation6] sm:$0x1]
        %v624 = vperm.slane %v622, 0
        %vm626 = vcmask 130048
        %v628 = vsel %vm626, %v552, 0
        %v631 = vsel %vm626, %v553, 0
        %633 = vmatpush.msra.mxu0 0.0
        %634 = vmatpush.msra.mxu0 0.0
        %635 = vmatpush.msra.mxu0 0.0
        %636 = vmatpush.msra.mxu0 0.0
        %637 = vmatpush.msra.mxu0 0.0
        %638 = vmatpush.msra.mxu0 0.0
        %639 = vmatpush.msra.mxu0 0.0
        %640 = vmatpush.msra.mxu0 0.0
        %641 = vmatpush.msra.mxu0 0.0
        %642 = vmatpush.msra.mxu0 0.0
        %643 = vmatpush.msra.mxu0 0.0
        %644 = vmatpush.msra.mxu0 0.0
        %645 = vmatpush.msra.mxu0 0.0
        %646 = vmatpush.msra.mxu0 0.0
        %647 = vmatpush.msra.mxu0 %v621
        %648 = vmatpush.msra.mxu0 %v620
        %649 = vmatmul.f32.gmra.mxu0 %v628
        %v650 = vpop.f32.mrf.mxu0
        %v651 = vadd.f32 %v624, %v650
        %652 = vmatmul.f32.gmra.mxu0 %v631
        %v653 = vpop.f32.mrf.mxu0
        %v654 = vadd.f32 %v624, %v653
        %655 = vdwg.mxu0
        %656 = vst.msk [vmem:[#allocation2 + $0xa] sm:$0xff] %vm554, %v651
        %657 = vst.msk [vmem:[#allocation2 + $0x12] sm:$0xff] %vm554, %v654
        %v658 = vld [vmem:[%s3] sm:$0xff]
        %v659 = vld [vmem:[%s3 + $0x8] sm:$0x1]
        %v660 = vld [vmem:[#allocation2 + $0x5] sm:$0xff]
        %v661 = vld [vmem:[#allocation2 + $0xd] sm:$0xff]
        %v662 = vsel %vm602, 1, 0
        %v663 = vsel %vm603, 1, 0
        %vm664 = vcmp.eq.s32.totalorder %v662, 1
        %vm665 = vcmp.eq.s32.totalorder %v663, 1
        %v666 = vsel %vm664, %v660, 0.0
        %v667 = vsel %vm665, %v661, 0.0
        %v668 = vperm.slane %v658, 0
        %v669 = vmul.f32 %v666, %v668
        %v670 = vmul.f32 %v667, %v668
        %v671 = vadd.f32 %v669, 0.0
        %v672 = vadd.f32 %v670, 0.0
        %v673 = vld [vmem:[#allocation2 + $0x6] sm:$0xff]
        %v674 = vld [vmem:[#allocation2 + $0xe] sm:$0xff]
        %v675 = vperm.slane %v658, 1
        %v676 = vmul.f32 %v673, %v675
        %v677 = vmul.f32 %v674, %v675
        %v678 = vadd.f32 %v671, %v676
        %v679 = vadd.f32 %v672, %v677
        %v680 = vld [vmem:[#allocation2 + $0x7] sm:$0xff]
        %v681 = vld [vmem:[#allocation2 + $0xf] sm:$0xff]
        %v682 = vsel %vm610, 1, 0
        %v683 = vsel %vm611, 1, 0
        %vm684 = vcmp.eq.s32.totalorder %v682, 1
        %vm685 = vcmp.eq.s32.totalorder %v683, 1
        %v686 = vsel %vm684, %v680, 0.0
        %v687 = vsel %vm685, %v681, 0.0
        %v688 = vperm.slane %v658, 2
        %v689 = vmul.f32 %v686, %v688
        %v690 = vmul.f32 %v687, %v688
        %v691 = vadd.f32 %v678, %v689
        %v692 = vadd.f32 %v679, %v690
        %v693 = vld [vmem:[#allocation2 + $0x9] sm:$0xff]
        %v694 = vld [vmem:[#allocation2 + $0x11] sm:$0xff]
        %v695 = vsel %vm664, %v693, 0.0
        %v696 = vsel %vm665, %v694, 0.0
        %v697 = vperm.slane %v658, 3
        %v698 = vmul.f32 %v695, %v697
        %v699 = vmul.f32 %v696, %v697
        %v700 = vadd.f32 %v691, %v698
        %v701 = vadd.f32 %v692, %v699
        %v702 = vld [vmem:[#allocation2 + $0xa] sm:$0xff]
        %v703 = vld [vmem:[#allocation2 + $0x12] sm:$0xff]
        %v704 = vperm.slane %v658, 4
        %v705 = vmul.f32 %v702, %v704
        %v706 = vmul.f32 %v703, %v704
        %v707 = vadd.f32 %v700, %v705
        %v708 = vadd.f32 %v701, %v706
        %v709 = vld [vmem:[#allocation2 + $0xb] sm:$0xff]
        %v710 = vld [vmem:[#allocation2 + $0x13] sm:$0xff]
        %v711 = vsel %vm684, %v709, 0.0
        %v712 = vsel %vm685, %v710, 0.0
        %v713 = vperm.slane %v658, 5
        %v714 = vmul.f32 %v711, %v713
        %v715 = vmul.f32 %v712, %v713
        %v716 = vadd.f32 %v707, %v714
        %v717 = vadd.f32 %v708, %v715
        %v718 = vld [vmem:[#allocation2 + $0x15] sm:$0xff]
        %v719 = vsel %vm664, %v661, 0.0
        %v720 = vsel %vm665, %v718, 0.0
        %v721 = vperm.slane %v658, 6
        %v722 = vmul.f32 %v719, %v721
        %v723 = vmul.f32 %v720, %v721
        %v724 = vadd.f32 %v716, %v722
        %v725 = vadd.f32 %v717, %v723
        %v726 = vld [vmem:[#allocation2 + $0x16] sm:$0xff]
        %v727 = vperm.slane %v658, 7
        %v728 = vmul.f32 %v674, %v727
        %v729 = vmul.f32 %v726, %v727
        %v730 = vadd.f32 %v724, %v728
        %v731 = vadd.f32 %v725, %v729
        %v732 = vld [vmem:[#allocation2 + $0x17] sm:$0xff]
        %v733 = vsel %vm684, %v681, 0.0
        %v734 = vsel %vm685, %v732, 0.0
        %v735 = vperm.slane %v659, 0
        %v736 = vmul.f32 %v733, %v735
        %v737 = vmul.f32 %v734, %v735
        %v738 = vadd.f32 %v730, %v736
        %v739 = vadd.f32 %v731, %v737
        %v740 = vld [vmem:[#allocation8] sm:$0x1]
        %v742 = vperm.slane %v740, 0
        %v744 = vadd.f32 %v738, %v742
        %v745 = vadd.f32 %v739, %v742
        %748 = vrot.lane.b32.xlu0 %v651, 120
        %v749 = vpop.permute.xlu0 %748
        %750 = vrot.lane.b32.xlu0 %v654, 120
        %v751 = vpop.permute.xlu0 %750
        %v753 = vsel %vm554, %v744, 0
        %v756 = vsel %vm554, %v745, 0
        %v758 = vsel %vm554, %v749, 0
        %v760 = vsel %vm554, %v751, 0
        %762 = vmatpush.xpose.msra.mxu0 0.0
        %763 = vmatpush.xpose.msra.mxu0 0.0
        %764 = vmatpush.xpose.msra.mxu0 0.0
        %765 = vmatpush.xpose.msra.mxu0 0.0
        %766 = vmatpush.xpose.msra.mxu0 0.0
        %767 = vmatpush.xpose.msra.mxu0 0.0
        %768 = vmatpush.xpose.msra.mxu0 0.0
        %769 = vmatpush.xpose.msra.mxu0 0.0
        %770 = vmatpush.xpose.msra.mxu0 0.0
        %771 = vmatpush.xpose.msra.mxu0 0.0
        %772 = vmatpush.xpose.msra.mxu0 0.0
        %773 = vmatpush.xpose.msra.mxu0 0.0
        %774 = vmatpush.xpose.msra.mxu0 0.0
        %775 = vmatpush.xpose.msra.mxu0 0.0
        %776 = vmatpush.xpose.msra.mxu0 %v760
        %777 = vmatpush.xpose.msra.mxu0 %v758
        %778 = vmatmul.f32.gmra.mxu0 %v753
        %v779 = vpop.f32.mrf.mxu0
        %v780 = vadd.f32 0.0, %v779
        %781 = vmatmul.f32.gmra.mxu0 %v756
        %v782 = vpop.f32.mrf.mxu0
        %v783 = vadd.f32 0.0, %v782
        %784 = vdwg.mxu0
        %v785 = vmul.f32 %v780, 0.35355338
        %v786 = vmul.f32 %v783, 0.35355338
        %v787 = vld [vmem:[#allocation9] sm:$0xff]
        %v788 = vld [vmem:[#allocation9 + $0x8] sm:$0xff]
        %v789 = vadd.f32 %v785, %v787
        %v790 = vadd.f32 %v786, %v788
        %v791 = vsel %vm626, %v789, -inf
        %792 = vmax.xlane.f32.xlu0 %v791
        %v793 = vpop.xlane.xlu0 %792
        %v794 = vsel %vm626, %v790, -inf
        %795 = vmax.xlane.f32.xlu0 %v794
        %v796 = vpop.xlane.xlu0 %795
        %v797 = vsub.f32 %v789, %v793
        %v798 = vsub.f32 %v790, %v796
        %v799 = vmul.f32 %v797, 1.442695
        %v800 = vpow.pop %v799
        %v801 = vmul.f32 %v798, 1.442695
        %v802 = vpow.pop %v801
        %v803 = vsel %vm626, %v800, 0.0
        %804 = vadd.xlane.f32.xlu0 %v803
        %v805 = vpop.xlane.xlu0 %804
        %v806 = vsel %vm626, %v802, 0.0
        %807 = vadd.xlane.f32.xlu0 %v806
        %v808 = vpop.xlane.xlu0 %807
        %v809 = vrcp.pop %v805
        %v810 = vmul.f32 %v805, %v809
        %v811 = vsub.f32 1.0, %v810
        %v812 = vmul.f32 %v809, %v811
        %v813 = vadd.f32 %v809, %v812
        %vm814 = vweird.f32 %v805
        %vm815 = vweird.f32 %v809
        %vm816 = vmor %vm814, %vm815
        %v817 = vsel %vm816, %v809, %v813
        %v818 = vand.u32 2147483647, %v805
        %vm819 = vcmp.eq.f32.partialorder %v818, 8.507059e+37
        %v820 = vand.u32 %v805, 2147483648
        %v821 = vor.u32 1.1754944e-38, %v820
        %v822 = vsel %vm819, %v821, %v817
        %v823 = vmul.f32 %v800, %v822
        %v824 = vrcp.pop %v808
        %v825 = vmul.f32 %v808, %v824
        %v826 = vsub.f32 1.0, %v825
        %v827 = vmul.f32 %v824, %v826
        %v828 = vadd.f32 %v824, %v827
        %vm829 = vweird.f32 %v808
        %vm830 = vweird.f32 %v824
        %vm831 = vmor %vm829, %vm830
        %v832 = vsel %vm831, %v824, %v828
        %v833 = vand.u32 2147483647, %v808
        %vm834 = vcmp.eq.f32.partialorder %v833, 8.507059e+37
        %v835 = vand.u32 %v808, 2147483648
        %v836 = vor.u32 1.1754944e-38, %v835
        %v837 = vsel %vm834, %v836, %v832
        %v838 = vmul.f32 %v802, %v837
        %839 = vrot.lane.b32.xlu0 %v651, 112
        %v840 = vpop.permute.xlu0 %839
        %841 = vrot.lane.b32.xlu0 %v654, 112
        %v842 = vpop.permute.xlu0 %841
        %v846 = vsel %vm626, %v823, 0
        %v849 = vsel %vm626, %v838, 0
        %851 = vmatpush.msra.mxu0 0.0
        %852 = vmatpush.msra.mxu0 0.0
        %853 = vmatpush.msra.mxu0 0.0
        %854 = vmatpush.msra.mxu0 0.0
        %855 = vmatpush.msra.mxu0 0.0
        %856 = vmatpush.msra.mxu0 0.0
        %857 = vmatpush.msra.mxu0 0.0
        %858 = vmatpush.msra.mxu0 0.0
        %859 = vmatpush.msra.mxu0 0.0
        %860 = vmatpush.msra.mxu0 0.0
        %861 = vmatpush.msra.mxu0 0.0
        %862 = vmatpush.msra.mxu0 0.0
        %863 = vmatpush.msra.mxu0 0.0
        %864 = vmatpush.msra.mxu0 0.0
        %865 = vmatpush.msra.mxu0 %v842
        %866 = vmatpush.msra.mxu0 %v840
        %867 = vmatmul.f32.gmra.mxu0 %v846
        %v868 = vpop.f32.mrf.mxu0
        %v869 = vadd.f32 0.0, %v868
        %870 = vmatmul.f32.gmra.mxu0 %v849
        %v871 = vpop.f32.mrf.mxu0
        %v872 = vadd.f32 0.0, %v871
        %873 = vdwg.mxu0
        %874 = vrot.lane.b32.xlu0 %v552, 112
        %v875 = vpop.permute.xlu0 %874
        %876 = vrot.lane.b32.xlu0 %v553, 112
        %v877 = vpop.permute.xlu0 %876
        %v880 = vadd.f32 %v869, %v875
        %v881 = vadd.f32 %v872, %v877
        %v882 = vld [vmem:[#allocation11] sm:$0xff]
        %v883 = vld [vmem:[#allocation11 + $0x8] sm:$0xff]
        %v884 = vld [vmem:[#allocation12] sm:$0x1]
        %v886 = vperm.slane %v884, 0
        %v889 = vsel %vm626, %v880, 0
        %v892 = vsel %vm626, %v881, 0
        %894 = vmatpush.msra.mxu0 0.0
        %895 = vmatpush.msra.mxu0 0.0
        %896 = vmatpush.msra.mxu0 0.0
        %897 = vmatpush.msra.mxu0 0.0
        %898 = vmatpush.msra.mxu0 0.0
        %899 = vmatpush.msra.mxu0 0.0
        %900 = vmatpush.msra.mxu0 0.0
        %901 = vmatpush.msra.mxu0 0.0
        %902 = vmatpush.msra.mxu0 0.0
        %903 = vmatpush.msra.mxu0 0.0
        %904 = vmatpush.msra.mxu0 0.0
        %905 = vmatpush.msra.mxu0 0.0
        %906 = vmatpush.msra.mxu0 0.0
        %907 = vmatpush.msra.mxu0 0.0
        %908 = vmatpush.msra.mxu0 %v883
        %909 = vmatpush.msra.mxu0 %v882
        %910 = vmatmul.f32.gmra.mxu0 %v889
        %v911 = vpop.f32.mrf.mxu0
        %v912 = vadd.f32 %v886, %v911
        %913 = vmatmul.f32.gmra.mxu0 %v892
        %v914 = vpop.f32.mrf.mxu0
        %v915 = vadd.f32 %v886, %v914
        %916 = vdwg.mxu0
        %917 = vst.msk [vmem:[#allocation2 + $0xa] sm:$0xff] %vm554, %v912
        %918 = vst.msk [vmem:[#allocation2 + $0x12] sm:$0xff] %vm554, %v915
        %v919 = vld [vmem:[%s8] sm:$0xff]
        %v920 = vld [vmem:[%s8 + $0x8] sm:$0xff]
        %v921 = vld [vmem:[%s8 + $0x10] sm:$0xff]
        %v922 = vld [vmem:[%s8 + $0x18] sm:$0x1]
        %v923 = vld [vmem:[#allocation2] sm:$0xff]
        %v924 = vld [vmem:[#allocation2 + $0x8] sm:$0xff]
        %v925 = vsel %vm594, 1, 0
        %v926 = vsel %vm595, 1, 0
        %vm927 = vcmp.eq.s32.totalorder %v925, 1
        %vm928 = vcmp.eq.s32.totalorder %v926, 1
        %v929 = vsel %vm927, %v923, 0.0
        %v930 = vsel %vm928, %v924, 0.0
        %v931 = vperm.slane %v919, 0
        %v932 = vmul.f32 %v929, %v931
        %v933 = vmul.f32 %v930, %v931
        %v934 = vadd.f32 %v932, 0.0
        %v935 = vadd.f32 %v933, 0.0
        %v936 = vld [vmem:[#allocation2 + $0x1] sm:$0xff]
        %v937 = vld [vmem:[#allocation2 + $0x9] sm:$0xff]
        %v938 = vsel %vm664, %v936, 0.0
        %v939 = vsel %vm665, %v937, 0.0
        %v940 = vperm.slane %v919, 1
        %v941 = vmul.f32 %v938, %v940
        %v942 = vmul.f32 %v939, %v940
        %v943 = vadd.f32 %v934, %v941
        %v944 = vadd.f32 %v935, %v942
        %v945 = vld [vmem:[#allocation2 + $0x2] sm:$0xff]
        %v946 = vld [vmem:[#allocation2 + $0xa] sm:$0xff]
        %v947 = vperm.slane %v919, 2
        %v948 = vmul.f32 %v945, %v947
        %v949 = vmul.f32 %v946, %v947
        %v950 = vadd.f32 %v943, %v948
        %v951 = vadd.f32 %v944, %v949
        %v952 = vld [vmem:[#allocation2 + $0x3] sm:$0xff]
        %v953 = vld [vmem:[#allocation2 + $0xb] sm:$0xff]
        %v954 = vsel %vm684, %v952, 0.0
        %v955 = vsel %vm685, %v953, 0.0
        %v956 = vperm.slane %v919, 3
        %v957 = vmul.f32 %v954, %v956
        %v958 = vmul.f32 %v955, %v956
        %v959 = vadd.f32 %v950, %v957
        %v960 = vadd.f32 %v951, %v958
        %v961 = vld [vmem:[#allocation2 + $0x4] sm:$0xff]
        %v962 = vld [vmem:[#allocation2 + $0xc] sm:$0xff]
        %v963 = vsel %vm618, 1, 0
        %v964 = vsel %vm619, 1, 0
        %vm965 = vcmp.eq.s32.totalorder %v963, 1
        %vm966 = vcmp.eq.s32.totalorder %v964, 1
        %v967 = vsel %vm965, %v961, 0.0
        %v968 = vsel %vm966, %v962, 0.0
        %v969 = vperm.slane %v919, 4
        %v970 = vmul.f32 %v967, %v969
        %v971 = vmul.f32 %v968, %v969
        %v972 = vadd.f32 %v959, %v970
        %v973 = vadd.f32 %v960, %v971
        %v974 = vsel %vm927, %v961, 0.0
        %v975 = vsel %vm928, %v962, 0.0
        %v976 = vperm.slane %v919, 5
        %v977 = vmul.f32 %v974, %v976
        %v978 = vmul.f32 %v975, %v976
        %v979 = vadd.f32 %v972, %v977
        %v980 = vadd.f32 %v973, %v978
        %v981 = vld [vmem:[#allocation2 + $0x5] sm:$0xff]
        %v982 = vld [vmem:[#allocation2 + $0xd] sm:$0xff]
        %v983 = vsel %vm664, %v981, 0.0
        %v984 = vsel %vm665, %v982, 0.0
        %v985 = vperm.slane %v919, 6
        %v986 = vmul.f32 %v983, %v985
        %v987 = vmul.f32 %v984, %v985
        %v988 = vadd.f32 %v979, %v986
        %v989 = vadd.f32 %v980, %v987
        %v990 = vld [vmem:[#allocation2 + $0x6] sm:$0xff]
        %v991 = vld [vmem:[#allocation2 + $0xe] sm:$0xff]
        %v992 = vperm.slane %v919, 7
        %v993 = vmul.f32 %v990, %v992
        %v994 = vmul.f32 %v991, %v992
        %v995 = vadd.f32 %v988, %v993
        %v996 = vadd.f32 %v989, %v994
        %v997 = vld [vmem:[#allocation2 + $0x7] sm:$0xff]
        %v998 = vld [vmem:[#allocation2 + $0xf] sm:$0xff]
        %v999 = vsel %vm684, %v997, 0.0
        %v1000 = vsel %vm685, %v998, 0.0
        %v1001 = vperm.slane %v920, 0
        %v1002 = vmul.f32 %v999, %v1001
        %v1003 = vmul.f32 %v1000, %v1001
        %v1004 = vadd.f32 %v995, %v1002
        %v1005 = vadd.f32 %v996, %v1003
        %v1006 = vld [vmem:[#allocation2 + $0x10] sm:$0xff]
        %v1007 = vsel %vm965, %v924, 0.0
        %v1008 = vsel %vm966, %v1006, 0.0
        %v1009 = vperm.slane %v920, 1
        %v1010 = vmul.f32 %v1007, %v1009
        %v1011 = vmul.f32 %v1008, %v1009
        %v1012 = vadd.f32 %v1004, %v1010
        %v1013 = vadd.f32 %v1005, %v1011
        %v1014 = vsel %vm927, %v924, 0.0
        %v1015 = vsel %vm928, %v1006, 0.0
        %v1016 = vperm.slane %v920, 2
        %v1017 = vmul.f32 %v1014, %v1016
        %v1018 = vmul.f32 %v1015, %v1016
        %v1019 = vadd.f32 %v1012, %v1017
        %v1020 = vadd.f32 %v1013, %v1018
        %v1021 = vld [vmem:[#allocation2 + $0x11] sm:$0xff]
        %v1022 = vsel %vm664, %v937, 0.0
        %v1023 = vsel %vm665, %v1021, 0.0
        %v1024 = vperm.slane %v920, 3
        %v1025 = vmul.f32 %v1022, %v1024
        %v1026 = vmul.f32 %v1023, %v1024
        %v1027 = vadd.f32 %v1019, %v1025
        %v1028 = vadd.f32 %v1020, %v1026
        %v1029 = vld [vmem:[#allocation2 + $0x12] sm:$0xff]
        %v1030 = vperm.slane %v920, 4
        %v1031 = vmul.f32 %v946, %v1030
        %v1032 = vmul.f32 %v1029, %v1030
        %v1033 = vadd.f32 %v1027, %v1031
        %v1034 = vadd.f32 %v1028, %v1032
        %v1035 = vld [vmem:[#allocation2 + $0x13] sm:$0xff]
        %v1036 = vsel %vm684, %v953, 0.0
        %v1037 = vsel %vm685, %v1035, 0.0
        %v1038 = vperm.slane %v920, 5
        %v1039 = vmul.f32 %v1036, %v1038
        %v1040 = vmul.f32 %v1037, %v1038
        %v1041 = vadd.f32 %v1033, %v1039
        %v1042 = vadd.f32 %v1034, %v1040
        %v1043 = vld [vmem:[#allocation2 + $0x14] sm:$0xff]
        %v1044 = vsel %vm965, %v962, 0.0
        %v1045 = vsel %vm966, %v1043, 0.0
        %v1046 = vperm.slane %v920, 6
        %v1047 = vmul.f32 %v1044, %v1046
        %v1048 = vmul.f32 %v1045, %v1046
        %v1049 = vadd.f32 %v1041, %v1047
        %v1050 = vadd.f32 %v1042, %v1048
        %v1051 = vsel %vm927, %v962, 0.0
        %v1052 = vsel %vm928, %v1043, 0.0
        %v1053 = vperm.slane %v920, 7
        %v1054 = vmul.f32 %v1051, %v1053
        %v1055 = vmul.f32 %v1052, %v1053
        %v1056 = vadd.f32 %v1049, %v1054
        %v1057 = vadd.f32 %v1050, %v1055
        %v1058 = vld [vmem:[#allocation2 + $0x15] sm:$0xff]
        %v1059 = vsel %vm664, %v982, 0.0
        %v1060 = vsel %vm665, %v1058, 0.0
        %v1061 = vperm.slane %v921, 0
        %v1062 = vmul.f32 %v1059, %v1061
        %v1063 = vmul.f32 %v1060, %v1061
        %v1064 = vadd.f32 %v1056, %v1062
        %v1065 = vadd.f32 %v1057, %v1063
        %v1066 = vld [vmem:[#allocation2 + $0x16] sm:$0xff]
        %v1067 = vperm.slane %v921, 1
        %v1068 = vmul.f32 %v991, %v1067
        %v1069 = vmul.f32 %v1066, %v1067
        %v1070 = vadd.f32 %v1064, %v1068
        %v1071 = vadd.f32 %v1065, %v1069
        %v1072 = vld [vmem:[#allocation2 + $0x17] sm:$0xff]
        %v1073 = vsel %vm684, %v998, 0.0
        %v1074 = vsel %vm685, %v1072, 0.0
        %v1075 = vperm.slane %v921, 2
        %v1076 = vmul.f32 %v1073, %v1075
        %v1077 = vmul.f32 %v1074, %v1075
        %v1078 = vadd.f32 %v1070, %v1076
        %v1079 = vadd.f32 %v1071, %v1077
        %v1080 = vld [vmem:[#allocation2 + $0x18] sm:$0xff]
        %v1081 = vsel %vm965, %v1006, 0.0
        %v1082 = vsel %vm966, %v1080, 0.0
        %v1083 = vperm.slane %v921, 3
        %v1084 = vmul.f32 %v1081, %v1083
        %v1085 = vmul.f32 %v1082, %v1083
        %v1086 = vadd.f32 %v1078, %v1084
        %v1087 = vadd.f32 %v1079, %v1085
        %v1088 = vsel %vm927, %v1006, 0.0
        %v1089 = vsel %vm928, %v1080, 0.0
        %v1090 = vperm.slane %v921, 4
        %v1091 = vmul.f32 %v1088, %v1090
        %v1092 = vmul.f32 %v1089, %v1090
        %v1093 = vadd.f32 %v1086, %v1091
        %v1094 = vadd.f32 %v1087, %v1092
        %v1095 = vld [vmem:[#allocation2 + $0x19] sm:$0xff]
        %v1096 = vsel %vm664, %v1021, 0.0
        %v1097 = vsel %vm665, %v1095, 0.0
        %v1098 = vperm.slane %v921, 5
        %v1099 = vmul.f32 %v1096, %v1098
        %v1100 = vmul.f32 %v1097, %v1098
        %v1101 = vadd.f32 %v1093, %v1099
        %v1102 = vadd.f32 %v1094, %v1100
        %v1103 = vld [vmem:[#allocation2 + $0x1a] sm:$0xff]
        %v1104 = vperm.slane %v921, 6
        %v1105 = vmul.f32 %v1029, %v1104
        %v1106 = vmul.f32 %v1103, %v1104
        %v1107 = vadd.f32 %v1101, %v1105
        %v1108 = vadd.f32 %v1102, %v1106
        %v1109 = vld [vmem:[#allocation2 + $0x1b] sm:$0xff]
        %v1110 = vsel %vm684, %v1035, 0.0
        %v1111 = vsel %vm685, %v1109, 0.0
        %v1112 = vperm.slane %v921, 7
        %v1113 = vmul.f32 %v1110, %v1112
        %v1114 = vmul.f32 %v1111, %v1112
        %v1115 = vadd.f32 %v1107, %v1113
        %v1116 = vadd.f32 %v1108, %v1114
        %v1117 = vld [vmem:[#allocation2 + $0x1c] sm:$0xff]
        %v1118 = vsel %vm965, %v1043, 0.0
        %v1119 = vsel %vm966, %v1117, 0.0
        %v1120 = vperm.slane %v922, 0
        %v1121 = vmul.f32 %v1118, %v1120
        %v1122 = vmul.f32 %v1119, %v1120
        %v1123 = vadd.f32 %v1115, %v1121
        %v1124 = vadd.f32 %v1116, %v1122
        %v1125 = vld [vmem:[#allocation14] sm:$0x1]
        %v1127 = vperm.slane %v1125, 0
        %v1129 = vadd.f32 %v1123, %v1127
        %v1130 = vadd.f32 %v1124, %v1127
        %1133 = vrot.lane.b32.xlu0 %v912, 120
        %v1134 = vpop.permute.xlu0 %1133
        %1135 = vrot.lane.b32.xlu0 %v915, 120
        %v1136 = vpop.permute.xlu0 %1135
        %v1138 = vsel %vm554, %v1129, 0
        %v1141 = vsel %vm554, %v1130, 0
        %v1143 = vsel %vm554, %v1134, 0
        %v1145 = vsel %vm554, %v1136, 0
        %1147 = vmatpush.xpose.msra.mxu0 0.0
        %1148 = vmatpush.xpose.msra.mxu0 0.0
        %1149 = vmatpush.xpose.msra.mxu0 0.0
        %1150 = vmatpush.xpose.msra.mxu0 0.0
        %1151 = vmatpush.xpose.msra.mxu0 0.0
        %1152 = vmatpush.xpose.msra.mxu0 0.0
        %1153 = vmatpush.xpose.msra.mxu0 0.0
        %1154 = vmatpush.xpose.msra.mxu0 0.0
        %1155 = vmatpush.xpose.msra.mxu0 0.0
        %1156 = vmatpush.xpose.msra.mxu0 0.0
        %1157 = vmatpush.xpose.msra.mxu0 0.0
        %1158 = vmatpush.xpose.msra.mxu0 0.0
        %1159 = vmatpush.xpose.msra.mxu0 0.0
        %1160 = vmatpush.xpose.msra.mxu0 0.0
        %1161 = vmatpush.xpose.msra.mxu0 %v1145
        %1162 = vmatpush.xpose.msra.mxu0 %v1143
        %1163 = vmatmul.f32.gmra.mxu0 %v1138
        %v1164 = vpop.f32.mrf.mxu0
        %v1165 = vadd.f32 0.0, %v1164
        %1166 = vmatmul.f32.gmra.mxu0 %v1141
        %v1167 = vpop.f32.mrf.mxu0
        %v1168 = vadd.f32 0.0, %v1167
        %1169 = vdwg.mxu0
        %v1170 = vmul.f32 %v1165, 0.35355338
        %v1171 = vmul.f32 %v1168, 0.35355338
        %v1172 = vld [vmem:[%s10] sm:$0xff]
        %v1173 = vld [vmem:[%s10 + $0x8] sm:$0xff]
        %v1174 = vadd.f32 %v1170, %v1172
        %v1175 = vadd.f32 %v1171, %v1173
        %v1176 = vsel %vm626, %v1174, -inf
        %1177 = vmax.xlane.f32.xlu0 %v1176
        %v1178 = vpop.xlane.xlu0 %1177
        %v1179 = vsel %vm626, %v1175, -inf
        %1180 = vmax.xlane.f32.xlu0 %v1179
        %v1181 = vpop.xlane.xlu0 %1180
        %v1182 = vsub.f32 %v1174, %v1178
        %v1183 = vsub.f32 %v1175, %v1181
        %v1184 = vmul.f32 %v1182, 1.442695
        %v1185 = vpow.pop %v1184
        %v1186 = vmul.f32 %v1183, 1.442695
        %v1187 = vpow.pop %v1186
        %v1188 = vsel %vm626, %v1185, 0.0
        %1189 = vadd.xlane.f32.xlu0 %v1188
        %v1190 = vpop.xlane.xlu0 %1189
        %v1191 = vsel %vm626, %v1187, 0.0
        %1192 = vadd.xlane.f32.xlu0 %v1191
        %v1193 = vpop.xlane.xlu0 %1192
        %v1194 = vrcp.pop %v1190
        %v1195 = vmul.f32 %v1190, %v1194
        %v1196 = vsub.f32 1.0, %v1195
        %v1197 = vmul.f32 %v1194, %v1196
        %v1198 = vadd.f32 %v1194, %v1197
        %vm1199 = vweird.f32 %v1190
        %vm1200 = vweird.f32 %v1194
        %vm1201 = vmor %vm1199, %vm1200
        %v1202 = vsel %vm1201, %v1194, %v1198
        %v1203 = vand.u32 2147483647, %v1190
        %vm1204 = vcmp.eq.f32.partialorder %v1203, 8.507059e+37
        %v1205 = vand.u32 %v1190, 2147483648
        %v1206 = vor.u32 1.1754944e-38, %v1205
        %v1207 = vsel %vm1204, %v1206, %v1202
        %v1208 = vmul.f32 %v1185, %v1207
        %v1209 = vrcp.pop %v1193
        %v1210 = vmul.f32 %v1193, %v1209
        %v1211 = vsub.f32 1.0, %v1210
        %v1212 = vmul.f32 %v1209, %v1211
        %v1213 = vadd.f32 %v1209, %v1212
        %vm1214 = vweird.f32 %v1193
        %vm1215 = vweird.f32 %v1209
        %vm1216 = vmor %vm1214, %vm1215
        %v1217 = vsel %vm1216, %v1209, %v1213
        %v1218 = vand.u32 2147483647, %v1193
        %vm1219 = vcmp.eq.f32.partialorder %v1218, 8.507059e+37
        %v1220 = vand.u32 %v1193, 2147483648
        %v1221 = vor.u32 1.1754944e-38, %v1220
        %v1222 = vsel %vm1219, %v1221, %v1217
        %v1223 = vmul.f32 %v1187, %v1222
        %1224 = vrot.lane.b32.xlu0 %v912, 112
        %v1225 = vpop.permute.xlu0 %1224
        %1226 = vrot.lane.b32.xlu0 %v915, 112
        %v1227 = vpop.permute.xlu0 %1226
        %v1231 = vsel %vm626, %v1208, 0
        %v1234 = vsel %vm626, %v1223, 0
        %1236 = vmatpush.msra.mxu0 0.0
        %1237 = vmatpush.msra.mxu0 0.0
        %1238 = vmatpush.msra.mxu0 0.0
        %1239 = vmatpush.msra.mxu0 0.0
        %1240 = vmatpush.msra.mxu0 0.0
        %1241 = vmatpush.msra.mxu0 0.0
        %1242 = vmatpush.msra.mxu0 0.0
        %1243 = vmatpush.msra.mxu0 0.0
        %1244 = vmatpush.msra.mxu0 0.0
        %1245 = vmatpush.msra.mxu0 0.0
        %1246 = vmatpush.msra.mxu0 0.0
        %1247 = vmatpush.msra.mxu0 0.0
        %1248 = vmatpush.msra.mxu0 0.0
        %1249 = vmatpush.msra.mxu0 0.0
        %1250 = vmatpush.msra.mxu0 %v1227
        %1251 = vmatpush.msra.mxu0 %v1225
        %1252 = vmatmul.f32.gmra.mxu0 %v1231
        %v1253 = vpop.f32.mrf.mxu0
        %v1254 = vadd.f32 0.0, %v1253
        %1255 = vmatmul.f32.gmra.mxu0 %v1234
        %v1256 = vpop.f32.mrf.mxu0
        %v1257 = vadd.f32 0.0, %v1256
        %1258 = vdwg.mxu0
        %1261 = vrot.lane.b32.xlu0 %v1254, 16
        %v1262 = vpop.permute.xlu0 %1261
        %1263 = vrot.lane.b32.xlu0 %v1257, 16
        %v1264 = vpop.permute.xlu0 %1263
        %v1267 = vsel %vm626, %v869, %v1262
        %v1268 = vsel %vm626, %v872, %v1264
        %v1269 = vmax.f32 %v1267, 0.0
        %v1270 = vmax.f32 %v1268, 0.0
        %v1271 = vld [vmem:[%s11] sm:$0xff]
        %v1272 = vld [vmem:[%s11 + $0x8] sm:$0xff]
        %v1273 = vld [vmem:[%s11 + $0x10] sm:$0xff]
        %v1274 = vld [vmem:[%s11 + $0x18] sm:$0xff]
        %v1275 = vld [vmem:[%s12] sm:$0x1]
        %v1277 = vperm.slane %v1275, 0
        %vm1279 = vcmask 261120
        %v1281 = vsel %vm1279, %v1269, 0
        %v1284 = vsel %vm1279, %v1270, 0
        %1286 = vmatpush.msra.mxu0 0.0
        %1287 = vmatpush.msra.mxu0 0.0
        %1288 = vmatpush.msra.mxu0 0.0
        %1289 = vmatpush.msra.mxu0 0.0
        %1290 = vmatpush.msra.mxu0 0.0
        %1291 = vmatpush.msra.mxu0 0.0
        %1292 = vmatpush.msra.mxu0 0.0
        %1293 = vmatpush.msra.mxu0 0.0
        %1294 = vmatpush.msra.mxu0 0.0
        %1295 = vmatpush.msra.mxu0 0.0
        %1296 = vmatpush.msra.mxu0 0.0
        %1297 = vmatpush.msra.mxu0 0.0
        %1298 = vmatpush.msra.mxu0 %v1274
        %1299 = vmatpush.msra.mxu0 %v1273
        %1300 = vmatpush.msra.mxu0 %v1272
        %1301 = vmatpush.msra.mxu0 %v1271
        %1302 = vmatmul.f32.gmra.mxu0 %v1281
        %v1303 = vpop.f32.mrf.mxu0
        %v1304 = vadd.f32 %v1277, %v1303
        %1305 = vmatmul.f32.gmra.mxu0 %v1284
        %v1306 = vpop.f32.mrf.mxu0
        %v1307 = vadd.f32 %v1277, %v1306
        %1308 = vdwg.mxu0
        %1309 = vst.msk [vmem:[%s551] sm:$0xff] %vm1279, %v1304
        %1310 = vst.msk [vmem:[%s551 + $0x8] sm:$0xff] %vm1279, %v1307
        %s1311 = sand.u32 %s319, 1
        %s1312 = scalar_lea.sflag [#allocation5], %s1311
        %s1313 = sand.u32 %s319, 1
        %s1314 = smul.addr %s1313, 16
        %s1315 = scalar_lea.vmem [#allocation15], %s1314
        // Predicated region
        $region101: #{tpu_custom_call.1} parent=71 // pred_check
          %p1316 = pneg %p329
        $region102: #{tpu_custom_call.1} parent=71 // pred_check_branch
          %1318 = sbr.rel (%p1316) target = $region104
        $region103: #{tpu_custom_call.1} parent=71 // pred_region
          %1320 = vsyncadd %s1312, 0
          %s1321 = smul.addr %s33, 2
          %s1322 = smul.addr %s1321, 8
          %s1323 = scalar_lea.hbm %s13, %s1322
          %s1324 = sshll.u32 %s1315, 4
          %s1325 = int_to_ptr.vmem [resolvable:$true] %s1324
          %s1326 = sshll.u32 %s1323, 4
          %s1327 = int_to_ptr.hbm [resolvable:$true] %s1326
          %1332 = dma.vmem_to_hbm [thread:$0]  %s1325, 256, %s1327, %s1312, 128, 128, 8
        $region104: #{tpu_custom_call.1} parent=71 // pred_fallthru
          _
      $region72: #{tpu_custom_call.1} parent=5 // pred_fallthru
        _
      %p1333 = scmp.le.s32.totalorder 2, %s28
      // Predicated region
      $region105: #{tpu_custom_call.1} parent=5 // pred_check
        %p1334 = pneg %p1333
      $region106: #{tpu_custom_call.1} parent=5 // pred_check_branch
        %1336 = sbr.rel (%p1334) target = $region108
      $region107: #{tpu_custom_call.1} parent=5 // pred_region
        %s1337 = ssub.s32 %s28, 2
        // Predicated region
        $region109: #{tpu_custom_call.1} parent=107 // pred_check
          %p1338 = pneg %p335
        $region110: #{tpu_custom_call.1} parent=107 // pred_check_branch
          %1340 = sbr.rel (%p1338) target = $region112
        $region111: #{tpu_custom_call.1} parent=107 // pred_region
          %s1341 = sand.u32 %s320, 1
          %s1342 = scalar_lea.sflag [#allocation5], %s1341
          %s1343 = sand.u32 %s320, 1
          %s1344 = smul.addr %s1343, 16
          %s1345 = scalar_lea.vmem [#allocation15], %s1344
          %1347 = dma.done %s1342, 256
        $region112: #{tpu_custom_call.1} parent=107 // pred_fallthru
          _
      $region108: #{tpu_custom_call.1} parent=5 // pred_fallthru
        _
    $region6: #{tpu_custom_call.1} parent=1 // loop_footer
      %s32 = sadd.s32 1, %s28
    $region7: #{tpu_custom_call.1} parent=1 // loop_footer_branch
      %27 = sbr.rel target = $region3
    $region8: #{tpu_custom_call.1} parent=1 // loop_exit
      _
    %1348 = vsyncpa [#allocation4], 1
    %s1349 = scalar_lea.sflag [#allocation4], 1
    %1350 = vsyncpa %s1349, 1
    %1351 = vsyncpa [#allocation7], 1
    %1352 = vsyncpa [#allocation10], 1
    %1353 = vsyncpa [#allocation13], 1
    %1354 = vsyncpa [#allocation5], 1
    %s1355 = scalar_lea.sflag [#allocation5], 1
    %1356 = vsyncpa %s1355, 1

</llo_original>
